<compile_context>
chip_gen: v6e
topology: v6e:2x2x1
jax: 0.10.0
libtpu: 0.0.40
codegen_flags: <defaults>
</compile_context>

<pallas_src>
import jax
import jax.numpy as jnp
from jax.experimental import pallas as pl
from jax.experimental.pallas import tpu as pltpu


def _make_kernel(num_layers: int, hidden_size: int, seq_len: int):
    H = hidden_size
    S = seq_len
    L = num_layers

    def kernel(*refs):
        # refs = (x, h0, c0, wih0, whh0, b0,
        #         w_1, b_1, ..., w_{L-1}, b_{L-1},
        #         w_out, b_out,
        #         pred_out, hN_out, cN_out)
        n_in = 6 + 2 * (L - 1) + 2
        x_ref, h0_ref, c0_ref = refs[0], refs[1], refs[2]
        wih0_ref, whh0_ref, b0_ref = refs[3], refs[4], refs[5]
        lw_refs = refs[6:6 + 2 * (L - 1)]
        w_out_ref, b_out_ref = refs[n_in - 2], refs[n_in - 1]
        pred_ref, hN_ref, cN_ref = refs[n_in], refs[n_in + 1], refs[n_in + 2]

        # Small weights live as values across the unrolled wavefront loop.
        whh0 = whh0_ref[...]                                       # (H, 4H)
        w_stk = [lw_refs[2 * i][...] for i in range(L - 1)]        # (2H, 4H)
        b_stk = [lw_refs[2 * i + 1][...] for i in range(L - 1)]    # (1, 4H)

        # Layer-0 batched input projection (bias folded), kept as a VALUE:
        # (S, 4H) = one f32 vreg tile at these shapes -> no VMEM scratch
        # store + per-step loads on the serial recurrence.
        xg0 = (
            jnp.dot(x_ref[...], wih0_ref[...], preferred_element_type=jnp.float32)
            + b0_ref[...]
        )

        # Running per-layer state, kept in vregs.
        h0_all = h0_ref[...]
        c0_all = c0_ref[...]
        h = [h0_all[l:l + 1, :] for l in range(L)]   # each (1, H)
        c = [c0_all[l:l + 1, :] for l in range(L)]

        last_h = [None] * S                          # h^{L-1}_t rows for the head GEMM

        def lstm_cell(gates, c_prev):
            # Whole-vreg sigmoid/tanh (EUP), then cheap lane slices.
            sig = jax.nn.sigmoid(gates)
            th = jnp.tanh(gates)
            i_g = sig[:, 0:H]
            f_g = sig[:, H:2 * H]
            g_g = th[:, 2 * H:3 * H]
            o_g = sig[:, 3 * H:4 * H]
            c_new = f_g * c_prev + i_g * g_g
            h_new = o_g * jnp.tanh(c_new)
            return h_new, c_new

        # Wavefront schedule, fully unrolled (S + L - 1 wavefronts).
        for w in range(S + L - 1):
            new_h = {}
            new_c = {}
            for l in range(L):
                t = w - l
                if t < 0 or t >= S:
                    continue
                if l == 0:
                    # Only the recurrent K=H matmul stays on the chain.
                    gates = xg0[t:t + 1, :] + jnp.dot(
                        h[0], whh0, preferred_element_type=jnp.float32)
                else:
                    # Fused input + recurrent projection: one K=2H matmul.
                    inp = jnp.concatenate([h[l - 1], h[l]], axis=1)     # (1, 2H)
                    gates = (
                        jnp.dot(inp, w_stk[l - 1], preferred_element_type=jnp.float32)
                        + b_stk[l - 1]
                    )
                h_n, c_n = lstm_cell(gates, c[l])
                new_h[l] = h_n
                new_c[l] = c_n
                if l == L - 1:
                    last_h[t] = h_n
            # Commit after computing the whole wavefront so every layer reads the
            # wavefront-(w-1) values of its own state and the layer-below output.
            for l, v in new_h.items():
                h[l] = v
            for l, v in new_c.items():
                c[l] = v

        # Linear head hoisted out of the recurrence: stack the last layer's h_t
        # rows (still in vregs) into one (S, H) slab, one M=S GEMM, one
        # lane-dense contiguous store (pred last dim padded to 128 multiple).
        h_seq = jnp.concatenate(last_h, axis=0)                          # (S, H)
        pred_ref[...] = (
            jnp.dot(h_seq, w_out_ref[...], preferred_element_type=jnp.float32)
            + b_out_ref[...]
        ).astype(pred_ref.dtype)

        # TODO(synk): hN/cN last dim (=H=32) < 128 lowers to masked stores; this
        # is a one-off epilogue cost at these shapes (pad/slice when H scales).
        hN_ref[...] = jnp.concatenate(h, axis=0)
        cN_ref[...] = jnp.concatenate(c, axis=0)

    return kernel


def seq_decoder_forward(x, hidden, cell, params, *, num_layers, hidden_size):
    """x: (S, input_size); hidden, cell: (num_layers, 1, hidden_size)."""
    S = x.shape[0]
    out_size = params["w_out"].shape[1]
    out_pad = ((out_size + 127) // 128) * 128          # lane-dense head output

    h0 = hidden[:, 0, :]
    c0 = cell[:, 0, :]

    # Layer 0: separate W_ih (batched precompute) and W_hh (per-step recurrent).
    weight_args = [params["wih_0"], params["whh_0"], params["b_0"]]
    # Layers l>=1: pre-stack [W_ih; W_hh] for the fused per-step K=2H dot.
    for l in range(1, num_layers):
        w_stk = jnp.concatenate([params[f"wih_{l}"], params[f"whh_{l}"]], axis=0)
        weight_args += [w_stk, params[f"b_{l}"]]

    w_out = params["w_out"]
    b_out = params["b_out"]
    if out_pad != out_size:
        w_out = jnp.pad(w_out, ((0, 0), (0, out_pad - out_size)))
        b_out = jnp.pad(b_out, ((0, 0), (0, out_pad - out_size)))
    weight_args += [w_out, b_out]

    kernel = _make_kernel(num_layers, hidden_size, S)
    n_inputs = 3 + len(weight_args)

    # Toy shapes: everything is resident in VMEM on v5e/v6e/v7x; no grid needed.
    vmem_spec = pl.BlockSpec(memory_space=pltpu.MemorySpace.VMEM)
    pred_pad, hN, cN = pl.pallas_call(
        kernel,
        out_shape=(
            jax.ShapeDtypeStruct((S, out_pad), jnp.float32),
            jax.ShapeDtypeStruct((num_layers, hidden_size), jnp.float32),
            jax.ShapeDtypeStruct((num_layers, hidden_size), jnp.float32),
        ),
        in_specs=[vmem_spec] * n_inputs,
        out_specs=(vmem_spec, vmem_spec, vmem_spec),
    )(x, h0, c0, *weight_args)

    pred = pred_pad[:, :out_size]
    return pred, hN[:, None, :], cN[:, None, :]


def reference_forward(x, hidden, cell, params, num_layers, hidden_size):
    """Pure-JAX reference matching PyTorch LSTM (eval mode) + Linear."""
    H = hidden_size
    h = [hidden[l, 0] for l in range(num_layers)]
    c = [cell[l, 0] for l in range(num_layers)]
    preds = []
    for t in range(x.shape[0]):
        inp = x[t]
        for l in range(num_layers):
            gates = inp @ params[f"wih_{l}"] + h[l] @ params[f"whh_{l}"] + params[f"b_{l}"][0]
            i_g = jax.nn.sigmoid(gates[0:H])
            f_g = jax.nn.sigmoid(gates[H:2 * H])
            g_g = jnp.tanh(gates[2 * H:3 * H])
            o_g = jax.nn.sigmoid(gates[3 * H:4 * H])
            c[l] = f_g * c[l] + i_g * g_g
            h[l] = o_g * jnp.tanh(c[l])
            inp = h[l]
        preds.append(inp @ params["w_out"] + params["b_out"][0])
    pred = jnp.stack(preds)
    return pred, jnp.stack(h)[:, None, :], jnp.stack(c)[:, None, :]


def init_params(key, input_size, hidden_size, output_size, num_layers):
    """Deterministic init mimicking PyTorch's uniform(-1/sqrt(H), 1/sqrt(H))."""
    k = 1.0 / jnp.sqrt(hidden_size)
    params = {}
    for l in range(num_layers):
        in_feats = input_size if l == 0 else hidden_size
        key, k1, k2, k3, k4 = jax.random.split(key, 5)
        params[f"wih_{l}"] = jax.random.uniform(k1, (in_feats, 4 * hidden_size),
                                                jnp.float32, -k, k)
        params[f"whh_{l}"] = jax.random.uniform(k2, (hidden_size, 4 * hidden_size),
                                                jnp.float32, -k, k)
        b_ih = jax.random.uniform(k3, (4 * hidden_size,), jnp.float32, -k, k)
        b_hh = jax.random.uniform(k4, (4 * hidden_size,), jnp.float32, -k, k)
        params[f"b_{l}"] = (b_ih + b_hh)[None, :]
    key, k5, k6 = jax.random.split(key, 3)
    params["w_out"] = jax.random.uniform(k5, (hidden_size, output_size), jnp.float32, -k, k)
    params["b_out"] = jax.random.uniform(k6, (output_size,), jnp.float32, -k, k)[None, :]
    return params


if __name__ == "__main__":
    # Small shapes consistent with the module's forward:
    #   x: (S, input_size); after unsqueeze(0) it becomes a batch-1 sequence of length S.
    input_size, output_size, hidden_size, num_layers = 16, 16, 32, 2
    S = 8

    key = jax.random.PRNGKey(0)
    key, kx, kh, kc = jax.random.split(key, 4)
    x = jax.random.normal(kx, (S, input_size), jnp.float32)
    hidden = jax.random.normal(kh, (num_layers, 1, hidden_size), jnp.float32)
    cell = jax.random.normal(kc, (num_layers, 1, hidden_size), jnp.float32)
    params = init_params(key, input_size, hidden_size, output_size, num_layers)

    pred, hN, cN = seq_decoder_forward(
        x, hidden, cell, params, num_layers=num_layers, hidden_size=hidden_size)
    jax.block_until_ready((pred, hN, cN))

    pred_ref, hN_ref, cN_ref = reference_forward(
        x, hidden, cell, params, num_layers, hidden_size)

    assert pred.shape == (S, output_size)
    assert hN.shape == (num_layers, 1, hidden_size)
    assert cN.shape == (num_layers, 1, hidden_size)
    assert jnp.allclose(pred, pred_ref, atol=1e-4, rtol=1e-4)
    assert jnp.allclose(hN, hN_ref, atol=1e-4, rtol=1e-4)
    assert jnp.allclose(cN, cN_ref, atol=1e-4, rtol=1e-4)

    print("KERNEL_OK")
</pallas_src>

<mosaic_0001>
module attributes {stable_mosaic.version = 11 : i64} {
  func.func @kernel(%arg0: memref<8x16xf32, #tpu.memory_space<vmem>>, %arg1: memref<2x32xf32, #tpu.memory_space<vmem>>, %arg2: memref<2x32xf32, #tpu.memory_space<vmem>>, %arg3: memref<16x128xf32, #tpu.memory_space<vmem>>, %arg4: memref<32x128xf32, #tpu.memory_space<vmem>>, %arg5: memref<1x128xf32, #tpu.memory_space<vmem>>, %arg6: memref<64x128xf32, #tpu.memory_space<vmem>>, %arg7: memref<1x128xf32, #tpu.memory_space<vmem>>, %arg8: memref<32x128xf32, #tpu.memory_space<vmem>>, %arg9: memref<1x128xf32, #tpu.memory_space<vmem>>, %arg10: memref<8x128xf32, #tpu.memory_space<vmem>>, %arg11: memref<2x32xf32, #tpu.memory_space<vmem>>, %arg12: memref<2x32xf32, #tpu.memory_space<vmem>>) attributes {dimension_semantics = [], scalar_prefetch = 0 : i64, scratch_operands = 0 : i64, tpu.core_type = #tpu.core_type<tc>} {
    %c0 = arith.constant 0 : index
    %c0_0 = arith.constant 0 : index
    %0 = vector.load %arg4[%c0, %c0_0] : memref<32x128xf32, #tpu.memory_space<vmem>>, vector<32x128xf32>
    %c0_1 = arith.constant 0 : index
    %c0_2 = arith.constant 0 : index
    %1 = vector.load %arg6[%c0_1, %c0_2] : memref<64x128xf32, #tpu.memory_space<vmem>>, vector<64x128xf32>
    %c0_3 = arith.constant 0 : index
    %c0_4 = arith.constant 0 : index
    %2 = vector.load %arg7[%c0_3, %c0_4] : memref<1x128xf32, #tpu.memory_space<vmem>>, vector<1x128xf32>
    %c0_5 = arith.constant 0 : index
    %c0_6 = arith.constant 0 : index
    %3 = vector.load %arg0[%c0_5, %c0_6] : memref<8x16xf32, #tpu.memory_space<vmem>>, vector<8x16xf32>
    %c0_7 = arith.constant 0 : index
    %c0_8 = arith.constant 0 : index
    %4 = vector.load %arg3[%c0_7, %c0_8] : memref<16x128xf32, #tpu.memory_space<vmem>>, vector<16x128xf32>
    %cst = arith.constant dense<0.000000e+00> : vector<8x128xf32>
    %5 = tpu.matmul %3, %4, %cst {dimension_numbers = #tpu.dot_dimension_numbers<[1], [0], [0], [1], [0, 0, 1, 1], [], []>} : vector<8x16xf32>, vector<16x128xf32>, vector<8x128xf32> -> vector<8x128xf32>
    %c0_9 = arith.constant 0 : index
    %c0_10 = arith.constant 0 : index
    %6 = vector.load %arg5[%c0_9, %c0_10] : memref<1x128xf32, #tpu.memory_space<vmem>>, vector<1x128xf32>
    %7 = vector.broadcast %6 : vector<1x128xf32> to vector<8x128xf32>
    %8 = arith.addf %5, %7 : vector<8x128xf32>
    %c0_11 = arith.constant 0 : index
    %c0_12 = arith.constant 0 : index
    %9 = vector.load %arg1[%c0_11, %c0_12] : memref<2x32xf32, #tpu.memory_space<vmem>>, vector<2x32xf32>
    %c0_13 = arith.constant 0 : index
    %c0_14 = arith.constant 0 : index
    %10 = vector.load %arg2[%c0_13, %c0_14] : memref<2x32xf32, #tpu.memory_space<vmem>>, vector<2x32xf32>
    %11 = vector.extract_strided_slice %9 {offsets = [0, 0], sizes = [1, 32], strides = [1, 1]} : vector<2x32xf32> to vector<1x32xf32>
    %12 = vector.extract_strided_slice %9 {offsets = [1, 0], sizes = [1, 32], strides = [1, 1]} : vector<2x32xf32> to vector<1x32xf32>
    %13 = vector.extract_strided_slice %10 {offsets = [0, 0], sizes = [1, 32], strides = [1, 1]} : vector<2x32xf32> to vector<1x32xf32>
    %14 = vector.extract_strided_slice %10 {offsets = [1, 0], sizes = [1, 32], strides = [1, 1]} : vector<2x32xf32> to vector<1x32xf32>
    %15 = vector.extract_strided_slice %8 {offsets = [0, 0], sizes = [1, 128], strides = [1, 1]} : vector<8x128xf32> to vector<1x128xf32>
    %cst_15 = arith.constant dense<0.000000e+00> : vector<1x128xf32>
    %16 = tpu.matmul %11, %0, %cst_15 {dimension_numbers = #tpu.dot_dimension_numbers<[1], [0], [0], [1], [0, 0, 1, 1], [], []>} : vector<1x32xf32>, vector<32x128xf32>, vector<1x128xf32> -> vector<1x128xf32>
    %17 = arith.addf %15, %16 : vector<1x128xf32>
    %18 = arith.negf %17 : vector<1x128xf32>
    %19 = math.exp %18 : vector<1x128xf32>
    %cst_16 = arith.constant 1.000000e+00 : f32
    %20 = vector.broadcast %cst_16 : f32 to vector<1x128xf32>
    %21 = arith.addf %20, %19 : vector<1x128xf32>
    %22 = arith.divf %20, %21 : vector<1x128xf32>
    %23 = math.tanh %17 : vector<1x128xf32>
    %24 = vector.extract_strided_slice %22 {offsets = [0, 0], sizes = [1, 32], strides = [1, 1]} : vector<1x128xf32> to vector<1x32xf32>
    %25 = vector.extract_strided_slice %22 {offsets = [0, 32], sizes = [1, 32], strides = [1, 1]} : vector<1x128xf32> to vector<1x32xf32>
    %26 = vector.extract_strided_slice %23 {offsets = [0, 64], sizes = [1, 32], strides = [1, 1]} : vector<1x128xf32> to vector<1x32xf32>
    %27 = vector.extract_strided_slice %22 {offsets = [0, 96], sizes = [1, 32], strides = [1, 1]} : vector<1x128xf32> to vector<1x32xf32>
    %28 = arith.mulf %25, %13 : vector<1x32xf32>
    %29 = arith.mulf %24, %26 : vector<1x32xf32>
    %30 = arith.addf %28, %29 : vector<1x32xf32>
    %31 = math.tanh %30 : vector<1x32xf32>
    %32 = arith.mulf %27, %31 : vector<1x32xf32>
    %33 = vector.extract_strided_slice %8 {offsets = [1, 0], sizes = [1, 128], strides = [1, 1]} : vector<8x128xf32> to vector<1x128xf32>
    %cst_17 = arith.constant dense<0.000000e+00> : vector<1x128xf32>
    %34 = tpu.matmul %32, %0, %cst_17 {dimension_numbers = #tpu.dot_dimension_numbers<[1], [0], [0], [1], [0, 0, 1, 1], [], []>} : vector<1x32xf32>, vector<32x128xf32>, vector<1x128xf32> -> vector<1x128xf32>
    %35 = arith.addf %33, %34 : vector<1x128xf32>
    %36 = arith.negf %35 : vector<1x128xf32>
    %37 = math.exp %36 : vector<1x128xf32>
    %cst_18 = arith.constant 1.000000e+00 : f32
    %38 = vector.broadcast %cst_18 : f32 to vector<1x128xf32>
    %39 = arith.addf %38, %37 : vector<1x128xf32>
    %40 = arith.divf %38, %39 : vector<1x128xf32>
    %41 = math.tanh %35 : vector<1x128xf32>
    %42 = vector.extract_strided_slice %40 {offsets = [0, 0], sizes = [1, 32], strides = [1, 1]} : vector<1x128xf32> to vector<1x32xf32>
    %43 = vector.extract_strided_slice %40 {offsets = [0, 32], sizes = [1, 32], strides = [1, 1]} : vector<1x128xf32> to vector<1x32xf32>
    %44 = vector.extract_strided_slice %41 {offsets = [0, 64], sizes = [1, 32], strides = [1, 1]} : vector<1x128xf32> to vector<1x32xf32>
    %45 = vector.extract_strided_slice %40 {offsets = [0, 96], sizes = [1, 32], strides = [1, 1]} : vector<1x128xf32> to vector<1x32xf32>
    %46 = arith.mulf %43, %30 : vector<1x32xf32>
    %47 = arith.mulf %42, %44 : vector<1x32xf32>
    %48 = arith.addf %46, %47 : vector<1x32xf32>
    %49 = math.tanh %48 : vector<1x32xf32>
    %50 = arith.mulf %45, %49 : vector<1x32xf32>
    %51 = tpu.concatenate %32, %12 in 1 : vector<1x32xf32>, vector<1x32xf32> -> vector<1x64xf32>
    %cst_19 = arith.constant dense<0.000000e+00> : vector<1x128xf32>
    %52 = tpu.matmul %51, %1, %cst_19 {dimension_numbers = #tpu.dot_dimension_numbers<[1], [0], [0], [1], [0, 0, 1, 1], [], []>} : vector<1x64xf32>, vector<64x128xf32>, vector<1x128xf32> -> vector<1x128xf32>
    %53 = arith.addf %52, %2 : vector<1x128xf32>
    %54 = arith.negf %53 : vector<1x128xf32>
    %55 = math.exp %54 : vector<1x128xf32>
    %cst_20 = arith.constant 1.000000e+00 : f32
    %56 = vector.broadcast %cst_20 : f32 to vector<1x128xf32>
    %57 = arith.addf %56, %55 : vector<1x128xf32>
    %58 = arith.divf %56, %57 : vector<1x128xf32>
    %59 = math.tanh %53 : vector<1x128xf32>
    %60 = vector.extract_strided_slice %58 {offsets = [0, 0], sizes = [1, 32], strides = [1, 1]} : vector<1x128xf32> to vector<1x32xf32>
    %61 = vector.extract_strided_slice %58 {offsets = [0, 32], sizes = [1, 32], strides = [1, 1]} : vector<1x128xf32> to vector<1x32xf32>
    %62 = vector.extract_strided_slice %59 {offsets = [0, 64], sizes = [1, 32], strides = [1, 1]} : vector<1x128xf32> to vector<1x32xf32>
    %63 = vector.extract_strided_slice %58 {offsets = [0, 96], sizes = [1, 32], strides = [1, 1]} : vector<1x128xf32> to vector<1x32xf32>
    %64 = arith.mulf %61, %14 : vector<1x32xf32>
    %65 = arith.mulf %60, %62 : vector<1x32xf32>
    %66 = arith.addf %64, %65 : vector<1x32xf32>
    %67 = math.tanh %66 : vector<1x32xf32>
    %68 = arith.mulf %63, %67 : vector<1x32xf32>
    %69 = vector.extract_strided_slice %8 {offsets = [2, 0], sizes = [1, 128], strides = [1, 1]} : vector<8x128xf32> to vector<1x128xf32>
    %cst_21 = arith.constant dense<0.000000e+00> : vector<1x128xf32>
    %70 = tpu.matmul %50, %0, %cst_21 {dimension_numbers = #tpu.dot_dimension_numbers<[1], [0], [0], [1], [0, 0, 1, 1], [], []>} : vector<1x32xf32>, vector<32x128xf32>, vector<1x128xf32> -> vector<1x128xf32>
    %71 = arith.addf %69, %70 : vector<1x128xf32>
    %72 = arith.negf %71 : vector<1x128xf32>
    %73 = math.exp %72 : vector<1x128xf32>
    %cst_22 = arith.constant 1.000000e+00 : f32
    %74 = vector.broadcast %cst_22 : f32 to vector<1x128xf32>
    %75 = arith.addf %74, %73 : vector<1x128xf32>
    %76 = arith.divf %74, %75 : vector<1x128xf32>
    %77 = math.tanh %71 : vector<1x128xf32>
    %78 = vector.extract_strided_slice %76 {offsets = [0, 0], sizes = [1, 32], strides = [1, 1]} : vector<1x128xf32> to vector<1x32xf32>
    %79 = vector.extract_strided_slice %76 {offsets = [0, 32], sizes = [1, 32], strides = [1, 1]} : vector<1x128xf32> to vector<1x32xf32>
    %80 = vector.extract_strided_slice %77 {offsets = [0, 64], sizes = [1, 32], strides = [1, 1]} : vector<1x128xf32> to vector<1x32xf32>
    %81 = vector.extract_strided_slice %76 {offsets = [0, 96], sizes = [1, 32], strides = [1, 1]} : vector<1x128xf32> to vector<1x32xf32>
    %82 = arith.mulf %79, %48 : vector<1x32xf32>
    %83 = arith.mulf %78, %80 : vector<1x32xf32>
    %84 = arith.addf %82, %83 : vector<1x32xf32>
    %85 = math.tanh %84 : vector<1x32xf32>
    %86 = arith.mulf %81, %85 : vector<1x32xf32>
    %87 = tpu.concatenate %50, %68 in 1 : vector<1x32xf32>, vector<1x32xf32> -> vector<1x64xf32>
    %cst_23 = arith.constant dense<0.000000e+00> : vector<1x128xf32>
    %88 = tpu.matmul %87, %1, %cst_23 {dimension_numbers = #tpu.dot_dimension_numbers<[1], [0], [0], [1], [0, 0, 1, 1], [], []>} : vector<1x64xf32>, vector<64x128xf32>, vector<1x128xf32> -> vector<1x128xf32>
    %89 = arith.addf %88, %2 : vector<1x128xf32>
    %90 = arith.negf %89 : vector<1x128xf32>
    %91 = math.exp %90 : vector<1x128xf32>
    %cst_24 = arith.constant 1.000000e+00 : f32
    %92 = vector.broadcast %cst_24 : f32 to vector<1x128xf32>
    %93 = arith.addf %92, %91 : vector<1x128xf32>
    %94 = arith.divf %92, %93 : vector<1x128xf32>
    %95 = math.tanh %89 : vector<1x128xf32>
    %96 = vector.extract_strided_slice %94 {offsets = [0, 0], sizes = [1, 32], strides = [1, 1]} : vector<1x128xf32> to vector<1x32xf32>
    %97 = vector.extract_strided_slice %94 {offsets = [0, 32], sizes = [1, 32], strides = [1, 1]} : vector<1x128xf32> to vector<1x32xf32>
    %98 = vector.extract_strided_slice %95 {offsets = [0, 64], sizes = [1, 32], strides = [1, 1]} : vector<1x128xf32> to vector<1x32xf32>
    %99 = vector.extract_strided_slice %94 {offsets = [0, 96], sizes = [1, 32], strides = [1, 1]} : vector<1x128xf32> to vector<1x32xf32>
    %100 = arith.mulf %97, %66 : vector<1x32xf32>
    %101 = arith.mulf %96, %98 : vector<1x32xf32>
    %102 = arith.addf %100, %101 : vector<1x32xf32>
    %103 = math.tanh %102 : vector<1x32xf32>
    %104 = arith.mulf %99, %103 : vector<1x32xf32>
    %105 = vector.extract_strided_slice %8 {offsets = [3, 0], sizes = [1, 128], strides = [1, 1]} : vector<8x128xf32> to vector<1x128xf32>
    %cst_25 = arith.constant dense<0.000000e+00> : vector<1x128xf32>
    %106 = tpu.matmul %86, %0, %cst_25 {dimension_numbers = #tpu.dot_dimension_numbers<[1], [0], [0], [1], [0, 0, 1, 1], [], []>} : vector<1x32xf32>, vector<32x128xf32>, vector<1x128xf32> -> vector<1x128xf32>
    %107 = arith.addf %105, %106 : vector<1x128xf32>
    %108 = arith.negf %107 : vector<1x128xf32>
    %109 = math.exp %108 : vector<1x128xf32>
    %cst_26 = arith.constant 1.000000e+00 : f32
    %110 = vector.broadcast %cst_26 : f32 to vector<1x128xf32>
    %111 = arith.addf %110, %109 : vector<1x128xf32>
    %112 = arith.divf %110, %111 : vector<1x128xf32>
    %113 = math.tanh %107 : vector<1x128xf32>
    %114 = vector.extract_strided_slice %112 {offsets = [0, 0], sizes = [1, 32], strides = [1, 1]} : vector<1x128xf32> to vector<1x32xf32>
    %115 = vector.extract_strided_slice %112 {offsets = [0, 32], sizes = [1, 32], strides = [1, 1]} : vector<1x128xf32> to vector<1x32xf32>
    %116 = vector.extract_strided_slice %113 {offsets = [0, 64], sizes = [1, 32], strides = [1, 1]} : vector<1x128xf32> to vector<1x32xf32>
    %117 = vector.extract_strided_slice %112 {offsets = [0, 96], sizes = [1, 32], strides = [1, 1]} : vector<1x128xf32> to vector<1x32xf32>
    %118 = arith.mulf %115, %84 : vector<1x32xf32>
    %119 = arith.mulf %114, %116 : vector<1x32xf32>
    %120 = arith.addf %118, %119 : vector<1x32xf32>
    %121 = math.tanh %120 : vector<1x32xf32>
    %122 = arith.mulf %117, %121 : vector<1x32xf32>
    %123 = tpu.concatenate %86, %104 in 1 : vector<1x32xf32>, vector<1x32xf32> -> vector<1x64xf32>
    %cst_27 = arith.constant dense<0.000000e+00> : vector<1x128xf32>
    %124 = tpu.matmul %123, %1, %cst_27 {dimension_numbers = #tpu.dot_dimension_numbers<[1], [0], [0], [1], [0, 0, 1, 1], [], []>} : vector<1x64xf32>, vector<64x128xf32>, vector<1x128xf32> -> vector<1x128xf32>
    %125 = arith.addf %124, %2 : vector<1x128xf32>
    %126 = arith.negf %125 : vector<1x128xf32>
    %127 = math.exp %126 : vector<1x128xf32>
    %cst_28 = arith.constant 1.000000e+00 : f32
    %128 = vector.broadcast %cst_28 : f32 to vector<1x128xf32>
    %129 = arith.addf %128, %127 : vector<1x128xf32>
    %130 = arith.divf %128, %129 : vector<1x128xf32>
    %131 = math.tanh %125 : vector<1x128xf32>
    %132 = vector.extract_strided_slice %130 {offsets = [0, 0], sizes = [1, 32], strides = [1, 1]} : vector<1x128xf32> to vector<1x32xf32>
    %133 = vector.extract_strided_slice %130 {offsets = [0, 32], sizes = [1, 32], strides = [1, 1]} : vector<1x128xf32> to vector<1x32xf32>
    %134 = vector.extract_strided_slice %131 {offsets = [0, 64], sizes = [1, 32], strides = [1, 1]} : vector<1x128xf32> to vector<1x32xf32>
    %135 = vector.extract_strided_slice %130 {offsets = [0, 96], sizes = [1, 32], strides = [1, 1]} : vector<1x128xf32> to vector<1x32xf32>
    %136 = arith.mulf %133, %102 : vector<1x32xf32>
    %137 = arith.mulf %132, %134 : vector<1x32xf32>
    %138 = arith.addf %136, %137 : vector<1x32xf32>
    %139 = math.tanh %138 : vector<1x32xf32>
    %140 = arith.mulf %135, %139 : vector<1x32xf32>
    %141 = vector.extract_strided_slice %8 {offsets = [4, 0], sizes = [1, 128], strides = [1, 1]} : vector<8x128xf32> to vector<1x128xf32>
    %cst_29 = arith.constant dense<0.000000e+00> : vector<1x128xf32>
    %142 = tpu.matmul %122, %0, %cst_29 {dimension_numbers = #tpu.dot_dimension_numbers<[1], [0], [0], [1], [0, 0, 1, 1], [], []>} : vector<1x32xf32>, vector<32x128xf32>, vector<1x128xf32> -> vector<1x128xf32>
    %143 = arith.addf %141, %142 : vector<1x128xf32>
    %144 = arith.negf %143 : vector<1x128xf32>
    %145 = math.exp %144 : vector<1x128xf32>
    %cst_30 = arith.constant 1.000000e+00 : f32
    %146 = vector.broadcast %cst_30 : f32 to vector<1x128xf32>
    %147 = arith.addf %146, %145 : vector<1x128xf32>
    %148 = arith.divf %146, %147 : vector<1x128xf32>
    %149 = math.tanh %143 : vector<1x128xf32>
    %150 = vector.extract_strided_slice %148 {offsets = [0, 0], sizes = [1, 32], strides = [1, 1]} : vector<1x128xf32> to vector<1x32xf32>
    %151 = vector.extract_strided_slice %148 {offsets = [0, 32], sizes = [1, 32], strides = [1, 1]} : vector<1x128xf32> to vector<1x32xf32>
    %152 = vector.extract_strided_slice %149 {offsets = [0, 64], sizes = [1, 32], strides = [1, 1]} : vector<1x128xf32> to vector<1x32xf32>
    %153 = vector.extract_strided_slice %148 {offsets = [0, 96], sizes = [1, 32], strides = [1, 1]} : vector<1x128xf32> to vector<1x32xf32>
    %154 = arith.mulf %151, %120 : vector<1x32xf32>
    %155 = arith.mulf %150, %152 : vector<1x32xf32>
    %156 = arith.addf %154, %155 : vector<1x32xf32>
    %157 = math.tanh %156 : vector<1x32xf32>
    %158 = arith.mulf %153, %157 : vector<1x32xf32>
    %159 = tpu.concatenate %122, %140 in 1 : vector<1x32xf32>, vector<1x32xf32> -> vector<1x64xf32>
    %cst_31 = arith.constant dense<0.000000e+00> : vector<1x128xf32>
    %160 = tpu.matmul %159, %1, %cst_31 {dimension_numbers = #tpu.dot_dimension_numbers<[1], [0], [0], [1], [0, 0, 1, 1], [], []>} : vector<1x64xf32>, vector<64x128xf32>, vector<1x128xf32> -> vector<1x128xf32>
    %161 = arith.addf %160, %2 : vector<1x128xf32>
    %162 = arith.negf %161 : vector<1x128xf32>
    %163 = math.exp %162 : vector<1x128xf32>
    %cst_32 = arith.constant 1.000000e+00 : f32
    %164 = vector.broadcast %cst_32 : f32 to vector<1x128xf32>
    %165 = arith.addf %164, %163 : vector<1x128xf32>
    %166 = arith.divf %164, %165 : vector<1x128xf32>
    %167 = math.tanh %161 : vector<1x128xf32>
    %168 = vector.extract_strided_slice %166 {offsets = [0, 0], sizes = [1, 32], strides = [1, 1]} : vector<1x128xf32> to vector<1x32xf32>
    %169 = vector.extract_strided_slice %166 {offsets = [0, 32], sizes = [1, 32], strides = [1, 1]} : vector<1x128xf32> to vector<1x32xf32>
    %170 = vector.extract_strided_slice %167 {offsets = [0, 64], sizes = [1, 32], strides = [1, 1]} : vector<1x128xf32> to vector<1x32xf32>
    %171 = vector.extract_strided_slice %166 {offsets = [0, 96], sizes = [1, 32], strides = [1, 1]} : vector<1x128xf32> to vector<1x32xf32>
    %172 = arith.mulf %169, %138 : vector<1x32xf32>
    %173 = arith.mulf %168, %170 : vector<1x32xf32>
    %174 = arith.addf %172, %173 : vector<1x32xf32>
    %175 = math.tanh %174 : vector<1x32xf32>
    %176 = arith.mulf %171, %175 : vector<1x32xf32>
    %177 = vector.extract_strided_slice %8 {offsets = [5, 0], sizes = [1, 128], strides = [1, 1]} : vector<8x128xf32> to vector<1x128xf32>
    %cst_33 = arith.constant dense<0.000000e+00> : vector<1x128xf32>
    %178 = tpu.matmul %158, %0, %cst_33 {dimension_numbers = #tpu.dot_dimension_numbers<[1], [0], [0], [1], [0, 0, 1, 1], [], []>} : vector<1x32xf32>, vector<32x128xf32>, vector<1x128xf32> -> vector<1x128xf32>
    %179 = arith.addf %177, %178 : vector<1x128xf32>
    %180 = arith.negf %179 : vector<1x128xf32>
    %181 = math.exp %180 : vector<1x128xf32>
    %cst_34 = arith.constant 1.000000e+00 : f32
    %182 = vector.broadcast %cst_34 : f32 to vector<1x128xf32>
    %183 = arith.addf %182, %181 : vector<1x128xf32>
    %184 = arith.divf %182, %183 : vector<1x128xf32>
    %185 = math.tanh %179 : vector<1x128xf32>
    %186 = vector.extract_strided_slice %184 {offsets = [0, 0], sizes = [1, 32], strides = [1, 1]} : vector<1x128xf32> to vector<1x32xf32>
    %187 = vector.extract_strided_slice %184 {offsets = [0, 32], sizes = [1, 32], strides = [1, 1]} : vector<1x128xf32> to vector<1x32xf32>
    %188 = vector.extract_strided_slice %185 {offsets = [0, 64], sizes = [1, 32], strides = [1, 1]} : vector<1x128xf32> to vector<1x32xf32>
    %189 = vector.extract_strided_slice %184 {offsets = [0, 96], sizes = [1, 32], strides = [1, 1]} : vector<1x128xf32> to vector<1x32xf32>
    %190 = arith.mulf %187, %156 : vector<1x32xf32>
    %191 = arith.mulf %186, %188 : vector<1x32xf32>
    %192 = arith.addf %190, %191 : vector<1x32xf32>
    %193 = math.tanh %192 : vector<1x32xf32>
    %194 = arith.mulf %189, %193 : vector<1x32xf32>
    %195 = tpu.concatenate %158, %176 in 1 : vector<1x32xf32>, vector<1x32xf32> -> vector<1x64xf32>
    %cst_35 = arith.constant dense<0.000000e+00> : vector<1x128xf32>
    %196 = tpu.matmul %195, %1, %cst_35 {dimension_numbers = #tpu.dot_dimension_numbers<[1], [0], [0], [1], [0, 0, 1, 1], [], []>} : vector<1x64xf32>, vector<64x128xf32>, vector<1x128xf32> -> vector<1x128xf32>
    %197 = arith.addf %196, %2 : vector<1x128xf32>
    %198 = arith.negf %197 : vector<1x128xf32>
    %199 = math.exp %198 : vector<1x128xf32>
    %cst_36 = arith.constant 1.000000e+00 : f32
    %200 = vector.broadcast %cst_36 : f32 to vector<1x128xf32>
    %201 = arith.addf %200, %199 : vector<1x128xf32>
    %202 = arith.divf %200, %201 : vector<1x128xf32>
    %203 = math.tanh %197 : vector<1x128xf32>
    %204 = vector.extract_strided_slice %202 {offsets = [0, 0], sizes = [1, 32], strides = [1, 1]} : vector<1x128xf32> to vector<1x32xf32>
    %205 = vector.extract_strided_slice %202 {offsets = [0, 32], sizes = [1, 32], strides = [1, 1]} : vector<1x128xf32> to vector<1x32xf32>
    %206 = vector.extract_strided_slice %203 {offsets = [0, 64], sizes = [1, 32], strides = [1, 1]} : vector<1x128xf32> to vector<1x32xf32>
    %207 = vector.extract_strided_slice %202 {offsets = [0, 96], sizes = [1, 32], strides = [1, 1]} : vector<1x128xf32> to vector<1x32xf32>
    %208 = arith.mulf %205, %174 : vector<1x32xf32>
    %209 = arith.mulf %204, %206 : vector<1x32xf32>
    %210 = arith.addf %208, %209 : vector<1x32xf32>
    %211 = math.tanh %210 : vector<1x32xf32>
    %212 = arith.mulf %207, %211 : vector<1x32xf32>
    %213 = vector.extract_strided_slice %8 {offsets = [6, 0], sizes = [1, 128], strides = [1, 1]} : vector<8x128xf32> to vector<1x128xf32>
    %cst_37 = arith.constant dense<0.000000e+00> : vector<1x128xf32>
    %214 = tpu.matmul %194, %0, %cst_37 {dimension_numbers = #tpu.dot_dimension_numbers<[1], [0], [0], [1], [0, 0, 1, 1], [], []>} : vector<1x32xf32>, vector<32x128xf32>, vector<1x128xf32> -> vector<1x128xf32>
    %215 = arith.addf %213, %214 : vector<1x128xf32>
    %216 = arith.negf %215 : vector<1x128xf32>
    %217 = math.exp %216 : vector<1x128xf32>
    %cst_38 = arith.constant 1.000000e+00 : f32
    %218 = vector.broadcast %cst_38 : f32 to vector<1x128xf32>
    %219 = arith.addf %218, %217 : vector<1x128xf32>
    %220 = arith.divf %218, %219 : vector<1x128xf32>
    %221 = math.tanh %215 : vector<1x128xf32>
    %222 = vector.extract_strided_slice %220 {offsets = [0, 0], sizes = [1, 32], strides = [1, 1]} : vector<1x128xf32> to vector<1x32xf32>
    %223 = vector.extract_strided_slice %220 {offsets = [0, 32], sizes = [1, 32], strides = [1, 1]} : vector<1x128xf32> to vector<1x32xf32>
    %224 = vector.extract_strided_slice %221 {offsets = [0, 64], sizes = [1, 32], strides = [1, 1]} : vector<1x128xf32> to vector<1x32xf32>
    %225 = vector.extract_strided_slice %220 {offsets = [0, 96], sizes = [1, 32], strides = [1, 1]} : vector<1x128xf32> to vector<1x32xf32>
    %226 = arith.mulf %223, %192 : vector<1x32xf32>
    %227 = arith.mulf %222, %224 : vector<1x32xf32>
    %228 = arith.addf %226, %227 : vector<1x32xf32>
    %229 = math.tanh %228 : vector<1x32xf32>
    %230 = arith.mulf %225, %229 : vector<1x32xf32>
    %231 = tpu.concatenate %194, %212 in 1 : vector<1x32xf32>, vector<1x32xf32> -> vector<1x64xf32>
    %cst_39 = arith.constant dense<0.000000e+00> : vector<1x128xf32>
    %232 = tpu.matmul %231, %1, %cst_39 {dimension_numbers = #tpu.dot_dimension_numbers<[1], [0], [0], [1], [0, 0, 1, 1], [], []>} : vector<1x64xf32>, vector<64x128xf32>, vector<1x128xf32> -> vector<1x128xf32>
    %233 = arith.addf %232, %2 : vector<1x128xf32>
    %234 = arith.negf %233 : vector<1x128xf32>
    %235 = math.exp %234 : vector<1x128xf32>
    %cst_40 = arith.constant 1.000000e+00 : f32
    %236 = vector.broadcast %cst_40 : f32 to vector<1x128xf32>
    %237 = arith.addf %236, %235 : vector<1x128xf32>
    %238 = arith.divf %236, %237 : vector<1x128xf32>
    %239 = math.tanh %233 : vector<1x128xf32>
    %240 = vector.extract_strided_slice %238 {offsets = [0, 0], sizes = [1, 32], strides = [1, 1]} : vector<1x128xf32> to vector<1x32xf32>
    %241 = vector.extract_strided_slice %238 {offsets = [0, 32], sizes = [1, 32], strides = [1, 1]} : vector<1x128xf32> to vector<1x32xf32>
    %242 = vector.extract_strided_slice %239 {offsets = [0, 64], sizes = [1, 32], strides = [1, 1]} : vector<1x128xf32> to vector<1x32xf32>
    %243 = vector.extract_strided_slice %238 {offsets = [0, 96], sizes = [1, 32], strides = [1, 1]} : vector<1x128xf32> to vector<1x32xf32>
    %244 = arith.mulf %241, %210 : vector<1x32xf32>
    %245 = arith.mulf %240, %242 : vector<1x32xf32>
    %246 = arith.addf %244, %245 : vector<1x32xf32>
    %247 = math.tanh %246 : vector<1x32xf32>
    %248 = arith.mulf %243, %247 : vector<1x32xf32>
    %249 = vector.extract_strided_slice %8 {offsets = [7, 0], sizes = [1, 128], strides = [1, 1]} : vector<8x128xf32> to vector<1x128xf32>
    %cst_41 = arith.constant dense<0.000000e+00> : vector<1x128xf32>
    %250 = tpu.matmul %230, %0, %cst_41 {dimension_numbers = #tpu.dot_dimension_numbers<[1], [0], [0], [1], [0, 0, 1, 1], [], []>} : vector<1x32xf32>, vector<32x128xf32>, vector<1x128xf32> -> vector<1x128xf32>
    %251 = arith.addf %249, %250 : vector<1x128xf32>
    %252 = arith.negf %251 : vector<1x128xf32>
    %253 = math.exp %252 : vector<1x128xf32>
    %cst_42 = arith.constant 1.000000e+00 : f32
    %254 = vector.broadcast %cst_42 : f32 to vector<1x128xf32>
    %255 = arith.addf %254, %253 : vector<1x128xf32>
    %256 = arith.divf %254, %255 : vector<1x128xf32>
    %257 = math.tanh %251 : vector<1x128xf32>
    %258 = vector.extract_strided_slice %256 {offsets = [0, 0], sizes = [1, 32], strides = [1, 1]} : vector<1x128xf32> to vector<1x32xf32>
    %259 = vector.extract_strided_slice %256 {offsets = [0, 32], sizes = [1, 32], strides = [1, 1]} : vector<1x128xf32> to vector<1x32xf32>
    %260 = vector.extract_strided_slice %257 {offsets = [0, 64], sizes = [1, 32], strides = [1, 1]} : vector<1x128xf32> to vector<1x32xf32>
    %261 = vector.extract_strided_slice %256 {offsets = [0, 96], sizes = [1, 32], strides = [1, 1]} : vector<1x128xf32> to vector<1x32xf32>
    %262 = arith.mulf %259, %228 : vector<1x32xf32>
    %263 = arith.mulf %258, %260 : vector<1x32xf32>
    %264 = arith.addf %262, %263 : vector<1x32xf32>
    %265 = math.tanh %264 : vector<1x32xf32>
    %266 = arith.mulf %261, %265 : vector<1x32xf32>
    %267 = tpu.concatenate %230, %248 in 1 : vector<1x32xf32>, vector<1x32xf32> -> vector<1x64xf32>
    %cst_43 = arith.constant dense<0.000000e+00> : vector<1x128xf32>
    %268 = tpu.matmul %267, %1, %cst_43 {dimension_numbers = #tpu.dot_dimension_numbers<[1], [0], [0], [1], [0, 0, 1, 1], [], []>} : vector<1x64xf32>, vector<64x128xf32>, vector<1x128xf32> -> vector<1x128xf32>
    %269 = arith.addf %268, %2 : vector<1x128xf32>
    %270 = arith.negf %269 : vector<1x128xf32>
    %271 = math.exp %270 : vector<1x128xf32>
    %cst_44 = arith.constant 1.000000e+00 : f32
    %272 = vector.broadcast %cst_44 : f32 to vector<1x128xf32>
    %273 = arith.addf %272, %271 : vector<1x128xf32>
    %274 = arith.divf %272, %273 : vector<1x128xf32>
    %275 = math.tanh %269 : vector<1x128xf32>
    %276 = vector.extract_strided_slice %274 {offsets = [0, 0], sizes = [1, 32], strides = [1, 1]} : vector<1x128xf32> to vector<1x32xf32>
    %277 = vector.extract_strided_slice %274 {offsets = [0, 32], sizes = [1, 32], strides = [1, 1]} : vector<1x128xf32> to vector<1x32xf32>
    %278 = vector.extract_strided_slice %275 {offsets = [0, 64], sizes = [1, 32], strides = [1, 1]} : vector<1x128xf32> to vector<1x32xf32>
    %279 = vector.extract_strided_slice %274 {offsets = [0, 96], sizes = [1, 32], strides = [1, 1]} : vector<1x128xf32> to vector<1x32xf32>
    %280 = arith.mulf %277, %246 : vector<1x32xf32>
    %281 = arith.mulf %276, %278 : vector<1x32xf32>
    %282 = arith.addf %280, %281 : vector<1x32xf32>
    %283 = math.tanh %282 : vector<1x32xf32>
    %284 = arith.mulf %279, %283 : vector<1x32xf32>
    %285 = tpu.concatenate %266, %284 in 1 : vector<1x32xf32>, vector<1x32xf32> -> vector<1x64xf32>
    %cst_45 = arith.constant dense<0.000000e+00> : vector<1x128xf32>
    %286 = tpu.matmul %285, %1, %cst_45 {dimension_numbers = #tpu.dot_dimension_numbers<[1], [0], [0], [1], [0, 0, 1, 1], [], []>} : vector<1x64xf32>, vector<64x128xf32>, vector<1x128xf32> -> vector<1x128xf32>
    %287 = arith.addf %286, %2 : vector<1x128xf32>
    %288 = arith.negf %287 : vector<1x128xf32>
    %289 = math.exp %288 : vector<1x128xf32>
    %cst_46 = arith.constant 1.000000e+00 : f32
    %290 = vector.broadcast %cst_46 : f32 to vector<1x128xf32>
    %291 = arith.addf %290, %289 : vector<1x128xf32>
    %292 = arith.divf %290, %291 : vector<1x128xf32>
    %293 = math.tanh %287 : vector<1x128xf32>
    %294 = vector.extract_strided_slice %292 {offsets = [0, 0], sizes = [1, 32], strides = [1, 1]} : vector<1x128xf32> to vector<1x32xf32>
    %295 = vector.extract_strided_slice %292 {offsets = [0, 32], sizes = [1, 32], strides = [1, 1]} : vector<1x128xf32> to vector<1x32xf32>
    %296 = vector.extract_strided_slice %293 {offsets = [0, 64], sizes = [1, 32], strides = [1, 1]} : vector<1x128xf32> to vector<1x32xf32>
    %297 = vector.extract_strided_slice %292 {offsets = [0, 96], sizes = [1, 32], strides = [1, 1]} : vector<1x128xf32> to vector<1x32xf32>
    %298 = arith.mulf %295, %282 : vector<1x32xf32>
    %299 = arith.mulf %294, %296 : vector<1x32xf32>
    %300 = arith.addf %298, %299 : vector<1x32xf32>
    %301 = math.tanh %300 : vector<1x32xf32>
    %302 = arith.mulf %297, %301 : vector<1x32xf32>
    %303 = tpu.concatenate %68, %104, %140, %176, %212, %248, %284, %302 in 0 : vector<1x32xf32>, vector<1x32xf32>, vector<1x32xf32>, vector<1x32xf32>, vector<1x32xf32>, vector<1x32xf32>, vector<1x32xf32>, vector<1x32xf32> -> vector<8x32xf32>
    %c0_47 = arith.constant 0 : index
    %c0_48 = arith.constant 0 : index
    %304 = vector.load %arg8[%c0_47, %c0_48] : memref<32x128xf32, #tpu.memory_space<vmem>>, vector<32x128xf32>
    %cst_49 = arith.constant dense<0.000000e+00> : vector<8x128xf32>
    %305 = tpu.matmul %303, %304, %cst_49 {dimension_numbers = #tpu.dot_dimension_numbers<[1], [0], [0], [1], [0, 0, 1, 1], [], []>} : vector<8x32xf32>, vector<32x128xf32>, vector<8x128xf32> -> vector<8x128xf32>
    %c0_50 = arith.constant 0 : index
    %c0_51 = arith.constant 0 : index
    %306 = vector.load %arg9[%c0_50, %c0_51] : memref<1x128xf32, #tpu.memory_space<vmem>>, vector<1x128xf32>
    %307 = vector.broadcast %306 : vector<1x128xf32> to vector<8x128xf32>
    %308 = arith.addf %305, %307 : vector<8x128xf32>
    %c0_52 = arith.constant 0 : index
    %c0_53 = arith.constant 0 : index
    %309 = vector.load %arg10[%c0_52, %c0_53] : memref<8x128xf32, #tpu.memory_space<vmem>>, vector<8x128xf32>
    tpu.vector_store %arg10[%c0_52, %c0_53], %308 {strides = array<i32>} : memref<8x128xf32, #tpu.memory_space<vmem>>, vector<8x128xf32>,
    %310 = tpu.concatenate %266, %302 in 0 : vector<1x32xf32>, vector<1x32xf32> -> vector<2x32xf32>
    %c0_54 = arith.constant 0 : index
    %c0_55 = arith.constant 0 : index
    %311 = vector.load %arg11[%c0_54, %c0_55] : memref<2x32xf32, #tpu.memory_space<vmem>>, vector<2x32xf32>
    tpu.vector_store %arg11[%c0_54, %c0_55], %310 {strides = array<i32>} : memref<2x32xf32, #tpu.memory_space<vmem>>, vector<2x32xf32>,
    %312 = tpu.concatenate %264, %300 in 0 : vector<1x32xf32>, vector<1x32xf32> -> vector<2x32xf32>
    %c0_56 = arith.constant 0 : index
    %c0_57 = arith.constant 0 : index
    %313 = vector.load %arg12[%c0_56, %c0_57] : memref<2x32xf32, #tpu.memory_space<vmem>>, vector<2x32xf32>
    tpu.vector_store %arg12[%c0_56, %c0_57], %312 {strides = array<i32>} : memref<2x32xf32, #tpu.memory_space<vmem>>, vector<2x32xf32>,
    return
  }
}

</mosaic_0001>

<llo_original>
// kernel: tpu_custom_call.1
$region0: #{tpu_custom_call.1}
  #allocation0 [shape = 'u32[]', space=smem, size = 0x4, offset = 0x4, fixed_abs, tag = 'smem constant byte address 0x4 - core index']
  #allocation1 [shape = 'u32[144,128]{1,0:T(1,128)}', space=vmem, size = 0x12000, scoped, tag = 'internal scratch']
  %s0 = inlined_call_operand.hbm [shape: f32[8,16], index: 0, kind: input, shape index: {}]
  %s1 = inlined_call_operand.hbm [shape: f32[2,32], index: 1, kind: input, shape index: {}]
  %s2 = inlined_call_operand.vmem [shape: f32[2,32], index: 2, kind: input, shape index: {}]
  %s3 = inlined_call_operand.hbm [shape: f32[16,128], index: 3, kind: input, shape index: {}]
  %s4 = inlined_call_operand.hbm [shape: f32[32,128], index: 4, kind: input, shape index: {}]
  %s5 = inlined_call_operand.vmem [shape: f32[1,128], index: 5, kind: input, shape index: {}]
  %s6 = inlined_call_operand.hbm [shape: f32[64,128], index: 6, kind: input, shape index: {}]
  %s7 = inlined_call_operand.vmem [shape: f32[1,128], index: 7, kind: input, shape index: {}]
  %s8 = inlined_call_operand.hbm [shape: f32[32,128], index: 8, kind: input, shape index: {}]
  %s9 = inlined_call_operand.vmem [shape: f32[1,128], index: 9, kind: input, shape index: {}]
  %s10 = inlined_call_operand.hbm [shape: f32[8,128], index: 10, kind: output, shape index: {0}]
  %s11 = inlined_call_operand.hbm [shape: f32[2,32], index: 11, kind: output, shape index: {1}]
  %s12 = inlined_call_operand.hbm [shape: f32[2,32], index: 12, kind: output, shape index: {2}]
  %13 = xla_tuple %s10, %s11, %s12
  %s14 = sld [smem:[#allocation0]]
  $region90: #{tpu_custom_call.1} parent=0
    _
  %s16 = ssub.s32 1, %s14
  %s17 = scalar_select 0, %s16, %s14
  $region1: #{tpu_custom_call.1} parent=0
    #allocation2 [shape = 'u8[4096]{0}', space=vmem, size = 0x1000, scoped, tag = 'input window, operand 0, single buffered']
    #allocation3 [shape = 's32[1]{0}', space=sflag, size = 0x4, scoped, tag = 'scoped memory for tpu_custom_call.1']
    #allocation4 [shape = 's32[1]{0}', space=sflag, size = 0x4, scoped, tag = 'scoped memory for tpu_custom_call.1']
    #allocation5 [shape = 'u8[1024]{0}', space=vmem, size = 0x400, scoped, tag = 'input window, operand 1, single buffered']
    #allocation6 [shape = 's32[1]{0}', space=sflag, size = 0x4, scoped, tag = 'scoped memory for tpu_custom_call.1']
    #allocation7 [shape = 'u8[8192]{0}', space=vmem, size = 0x2000, scoped, tag = 'input window, operand 3, single buffered']
    #allocation8 [shape = 'u8[16384]{0}', space=vmem, size = 0x4000, scoped, tag = 'input window, operand 4, single buffered']
    #allocation9 [shape = 's32[1]{0}', space=sflag, size = 0x4, scoped, tag = 'scoped memory for tpu_custom_call.1']
    #allocation10 [shape = 'u8[32768]{0}', space=vmem, size = 0x8000, scoped, tag = 'input window, operand 6, single buffered']
    #allocation11 [shape = 'u8[16384]{0}', space=vmem, size = 0x4000, scoped, tag = 'input window, operand 8, single buffered']
    #allocation12 [shape = 's32[1]{0}', space=sflag, size = 0x4, scoped, tag = 'scoped memory for tpu_custom_call.1']
    #allocation13 [shape = 'u8[4096]{0}', space=vmem, size = 0x1000, scoped, tag = 'output window, operand 0, single buffered']
    #allocation14 [shape = 'u8[1024]{0}', space=vmem, size = 0x400, scoped, tag = 'output window, operand 1, single buffered']
    #allocation15 [shape = 's32[1]{0}', space=sflag, size = 0x4, scoped, tag = 'scoped memory for tpu_custom_call.1']
    #allocation16 [shape = 'u8[1024]{0}', space=vmem, size = 0x400, scoped, tag = 'output window, operand 2, single buffered']
    %18 = vsyncpa [#allocation3], 0
    %19 = vsyncpa [#allocation6], 0
    %20 = vsyncpa [#allocation9], 0
    %21 = vsyncpa [#allocation12], 0
    %22 = vsyncpa [#allocation4], 0
    %23 = vsyncpa [#allocation15], 0
    // Predicated region
    $region2: #{tpu_custom_call.1} parent=1 // pred_check
      _
    $region3: #{tpu_custom_call.1} parent=1 // pred_check_branch
      %25 = sbr.rel (0) target = $region5
    $region4: #{tpu_custom_call.1} parent=1 // pred_region
      %s27 = ssub.s32 128, 128
      %28 = vsyncadd [#allocation3], %s27
      %s30 = sshll.u32 [#allocation2], 4
      %s31 = int_to_ptr.vmem [resolvable:$true] %s30
      %33 = dma.hbm_to_vmem [thread:$0]  %s0, 128, %s31, [#allocation3]
    $region5: #{tpu_custom_call.1} parent=1 // pred_fallthru
      _
    // Predicated region
    $region6: #{tpu_custom_call.1} parent=1 // pred_check
      _
    $region7: #{tpu_custom_call.1} parent=1 // pred_check_branch
      %35 = sbr.rel (0) target = $region9
    $region8: #{tpu_custom_call.1} parent=1 // pred_region
      %s37 = ssub.s32 32, 32
      %38 = vsyncadd [#allocation6], %s37
      %s40 = sshll.u32 [#allocation5], 4
      %s41 = int_to_ptr.vmem [resolvable:$true] %s40
      %43 = dma.hbm_to_vmem [thread:$0]  %s1, 32, %s41, [#allocation6]
    $region9: #{tpu_custom_call.1} parent=1 // pred_fallthru
      _
    // Predicated region
    $region10: #{tpu_custom_call.1} parent=1 // pred_check
      _
    $region11: #{tpu_custom_call.1} parent=1 // pred_check_branch
      %45 = sbr.rel (0) target = $region13
    $region12: #{tpu_custom_call.1} parent=1 // pred_region
      _
    $region13: #{tpu_custom_call.1} parent=1 // pred_fallthru
      _
    // Predicated region
    $region14: #{tpu_custom_call.1} parent=1 // pred_check
      _
    $region15: #{tpu_custom_call.1} parent=1 // pred_check_branch
      %47 = sbr.rel (0) target = $region17
    $region16: #{tpu_custom_call.1} parent=1 // pred_region
      %s49 = ssub.s32 256, 256
      %50 = vsyncadd [#allocation6], %s49
      %s51 = sshll.u32 [#allocation7], 4
      %s52 = int_to_ptr.vmem [resolvable:$true] %s51
      %57 = dma.hbm_to_vmem [thread:$0]  %s3, 256, %s52, [#allocation6], 128, 128, 8
    $region17: #{tpu_custom_call.1} parent=1 // pred_fallthru
      _
    // Predicated region
    $region18: #{tpu_custom_call.1} parent=1 // pred_check
      _
    $region19: #{tpu_custom_call.1} parent=1 // pred_check_branch
      %59 = sbr.rel (0) target = $region21
    $region20: #{tpu_custom_call.1} parent=1 // pred_region
      %s61 = ssub.s32 512, 512
      %62 = vsyncadd [#allocation9], %s61
      %s63 = sshll.u32 [#allocation8], 4
      %s64 = int_to_ptr.vmem [resolvable:$true] %s63
      %69 = dma.hbm_to_vmem [thread:$0]  %s4, 512, %s64, [#allocation9], 128, 128, 8
    $region21: #{tpu_custom_call.1} parent=1 // pred_fallthru
      _
    // Predicated region
    $region22: #{tpu_custom_call.1} parent=1 // pred_check
      _
    $region23: #{tpu_custom_call.1} parent=1 // pred_check_branch
      %71 = sbr.rel (0) target = $region25
    $region24: #{tpu_custom_call.1} parent=1 // pred_region
      _
    $region25: #{tpu_custom_call.1} parent=1 // pred_fallthru
      _
    // Predicated region
    $region26: #{tpu_custom_call.1} parent=1 // pred_check
      _
    $region27: #{tpu_custom_call.1} parent=1 // pred_check_branch
      %73 = sbr.rel (0) target = $region29
    $region28: #{tpu_custom_call.1} parent=1 // pred_region
      %s75 = ssub.s32 1024, 1024
      %76 = vsyncadd [#allocation9], %s75
      %s77 = sshll.u32 [#allocation10], 4
      %s78 = int_to_ptr.vmem [resolvable:$true] %s77
      %83 = dma.hbm_to_vmem [thread:$0]  %s6, 1024, %s78, [#allocation9], 128, 128, 8
    $region29: #{tpu_custom_call.1} parent=1 // pred_fallthru
      _
    // Predicated region
    $region30: #{tpu_custom_call.1} parent=1 // pred_check
      _
    $region31: #{tpu_custom_call.1} parent=1 // pred_check_branch
      %85 = sbr.rel (0) target = $region33
    $region32: #{tpu_custom_call.1} parent=1 // pred_region
      _
    $region33: #{tpu_custom_call.1} parent=1 // pred_fallthru
      _
    // Predicated region
    $region34: #{tpu_custom_call.1} parent=1 // pred_check
      _
    $region35: #{tpu_custom_call.1} parent=1 // pred_check_branch
      %87 = sbr.rel (0) target = $region37
    $region36: #{tpu_custom_call.1} parent=1 // pred_region
      %s89 = ssub.s32 512, 512
      %90 = vsyncadd [#allocation12], %s89
      %s91 = sshll.u32 [#allocation11], 4
      %s92 = int_to_ptr.vmem [resolvable:$true] %s91
      %97 = dma.hbm_to_vmem [thread:$0]  %s8, 512, %s92, [#allocation12], 128, 128, 8
    $region37: #{tpu_custom_call.1} parent=1 // pred_fallthru
      _
    // Predicated region
    $region38: #{tpu_custom_call.1} parent=1 // pred_check
      _
    $region39: #{tpu_custom_call.1} parent=1 // pred_check_branch
      %99 = sbr.rel (0) target = $region41
    $region40: #{tpu_custom_call.1} parent=1 // pred_region
      _
    $region41: #{tpu_custom_call.1} parent=1 // pred_fallthru
      _
    // Predicated region
    $region42: #{tpu_custom_call.1} parent=1 // pred_check
      _
    $region43: #{tpu_custom_call.1} parent=1 // pred_check_branch
      %101 = sbr.rel (0) target = $region45
    $region44: #{tpu_custom_call.1} parent=1 // pred_region
      %102 = dma.done [#allocation3], 128
    $region45: #{tpu_custom_call.1} parent=1 // pred_fallthru
      _
    // Predicated region
    $region46: #{tpu_custom_call.1} parent=1 // pred_check
      _
    $region47: #{tpu_custom_call.1} parent=1 // pred_check_branch
      %104 = sbr.rel (0) target = $region49
    $region48: #{tpu_custom_call.1} parent=1 // pred_region
      %105 = dma.done [#allocation6], 32
    $region49: #{tpu_custom_call.1} parent=1 // pred_fallthru
      _
    // Predicated region
    $region50: #{tpu_custom_call.1} parent=1 // pred_check
      _
    $region51: #{tpu_custom_call.1} parent=1 // pred_check_branch
      %107 = sbr.rel (0) target = $region53
    $region52: #{tpu_custom_call.1} parent=1 // pred_region
      %108 = dma.done [#allocation6], 256
    $region53: #{tpu_custom_call.1} parent=1 // pred_fallthru
      _
    // Predicated region
    $region54: #{tpu_custom_call.1} parent=1 // pred_check
      _
    $region55: #{tpu_custom_call.1} parent=1 // pred_check_branch
      %110 = sbr.rel (0) target = $region57
    $region56: #{tpu_custom_call.1} parent=1 // pred_region
      %111 = dma.done [#allocation9], 512
    $region57: #{tpu_custom_call.1} parent=1 // pred_fallthru
      _
    // Predicated region
    $region58: #{tpu_custom_call.1} parent=1 // pred_check
      _
    $region59: #{tpu_custom_call.1} parent=1 // pred_check_branch
      %113 = sbr.rel (0) target = $region61
    $region60: #{tpu_custom_call.1} parent=1 // pred_region
      %114 = dma.done [#allocation9], 1024
    $region61: #{tpu_custom_call.1} parent=1 // pred_fallthru
      _
    // Predicated region
    $region62: #{tpu_custom_call.1} parent=1 // pred_check
      _
    $region63: #{tpu_custom_call.1} parent=1 // pred_check_branch
      %116 = sbr.rel (0) target = $region65
    $region64: #{tpu_custom_call.1} parent=1 // pred_region
      %117 = dma.done [#allocation12], 512
    $region65: #{tpu_custom_call.1} parent=1 // pred_fallthru
      _
    %v118 = vld [vmem:[#allocation8] sm:$0xff]
    %v119 = vld [vmem:[#allocation8 + $0x8] sm:$0xff]
    %v120 = vld [vmem:[#allocation8 + $0x10] sm:$0xff]
    %v121 = vld [vmem:[#allocation8 + $0x18] sm:$0xff]
    %v122 = vld [vmem:[#allocation10] sm:$0xff]
    %v123 = vld [vmem:[#allocation10 + $0x8] sm:$0xff]
    %v124 = vld [vmem:[#allocation10 + $0x10] sm:$0xff]
    %v125 = vld [vmem:[#allocation10 + $0x18] sm:$0xff]
    %v126 = vld [vmem:[#allocation10 + $0x20] sm:$0xff]
    %v127 = vld [vmem:[#allocation10 + $0x28] sm:$0xff]
    %v128 = vld [vmem:[#allocation10 + $0x30] sm:$0xff]
    %v129 = vld [vmem:[#allocation10 + $0x38] sm:$0xff]
    %v130 = vld [vmem:[%s7] sm:$0x1]
    %v131 = vld [vmem:[#allocation2] sm:$0xff]
    %v132 = vld [vmem:[#allocation7] sm:$0xff]
    %v133 = vld [vmem:[#allocation7 + $0x8] sm:$0xff]
    %v134 = vld [vmem:[%s5] sm:$0x1]
    %v136 = vlaneseq
    %v137 = vshrl.u32 %v136, 7
    %v138 = vsub.s32 0, %v137
    %v139 = vrot.slane %v134, %v138
    %vm141 = vcmask 130048
    %v143 = vsel %vm141, %v131, 0
    %145 = vmatprep.subr.mxu0 0.0
    %146 = vmatpush1.msra.mxu0 0.0
    %147 = vmatprep.subr.mxu0 0.0
    %148 = vmatpush1.msra.mxu0 0.0
    %149 = vmatprep.subr.mxu0 0.0
    %150 = vmatpush1.msra.mxu0 0.0
    %151 = vmatprep.subr.mxu0 0.0
    %152 = vmatpush1.msra.mxu0 0.0
    %153 = vmatprep.subr.mxu0 0.0
    %154 = vmatpush1.msra.mxu0 0.0
    %155 = vmatprep.subr.mxu0 0.0
    %156 = vmatpush1.msra.mxu0 0.0
    %157 = vmatprep.subr.mxu0 0.0
    %158 = vmatpush1.msra.mxu0 0.0
    %159 = vmatprep.subr.mxu0 0.0
    %160 = vmatpush1.msra.mxu0 0.0
    %161 = vmatprep.subr.mxu0 0.0
    %162 = vmatpush1.msra.mxu0 0.0
    %163 = vmatprep.subr.mxu0 0.0
    %164 = vmatpush1.msra.mxu0 0.0
    %165 = vmatprep.subr.mxu0 0.0
    %166 = vmatpush1.msra.mxu0 0.0
    %167 = vmatprep.subr.mxu0 0.0
    %168 = vmatpush1.msra.mxu0 0.0
    %169 = vmatprep.subr.mxu0 0.0
    %170 = vmatpush1.msra.mxu0 0.0
    %171 = vmatprep.subr.mxu0 0.0
    %172 = vmatpush1.msra.mxu0 0.0
    %173 = vmatprep.subr.mxu0 0.0
    %174 = vmatpush1.msra.mxu0 %v133
    %175 = vmatprep.subr.mxu0 0.0
    %176 = vmatpush1.msra.mxu0 %v132
    %177 = vmatprep.subr.mxu0 0.0
    %178 = vmatpush2.msra.mxu0 0.0
    %179 = vmatprep.subr.mxu0 0.0
    %180 = vmatpush2.msra.mxu0 0.0
    %181 = vmatprep.subr.mxu0 0.0
    %182 = vmatpush2.msra.mxu0 0.0
    %183 = vmatprep.subr.mxu0 0.0
    %184 = vmatpush2.msra.mxu0 0.0
    %185 = vmatprep.subr.mxu0 0.0
    %186 = vmatpush2.msra.mxu0 0.0
    %187 = vmatprep.subr.mxu0 0.0
    %188 = vmatpush2.msra.mxu0 0.0
    %189 = vmatprep.subr.mxu0 0.0
    %190 = vmatpush2.msra.mxu0 0.0
    %191 = vmatprep.subr.mxu0 0.0
    %192 = vmatpush2.msra.mxu0 0.0
    %193 = vmatprep.subr.mxu0 0.0
    %194 = vmatpush2.msra.mxu0 0.0
    %195 = vmatprep.subr.mxu0 0.0
    %196 = vmatpush2.msra.mxu0 0.0
    %197 = vmatprep.subr.mxu0 0.0
    %198 = vmatpush2.msra.mxu0 0.0
    %199 = vmatprep.subr.mxu0 0.0
    %200 = vmatpush2.msra.mxu0 0.0
    %201 = vmatprep.subr.mxu0 0.0
    %202 = vmatpush2.msra.mxu0 0.0
    %203 = vmatprep.subr.mxu0 0.0
    %204 = vmatpush2.msra.mxu0 0.0
    %205 = vmatprep.subr.mxu0 0.0
    %206 = vmatpush2.msra.mxu0 0.0
    %207 = vmatprep.subr.mxu0 0.0
    %208 = vmatpush2.msra.mxu0 0.0
    %209 = vmatprep.mubr.f32.mxu0 0.0
    %210 = vmatmul.mubr.f32.gmra.mxu0 %v143
    %v211 = vpop.f32.mrf.mxu0
    %v212 = vadd.f32 %v139, %v211
    %v213 = vpop.f32.mrf.mxu0
    %214 = vdwg.mxu0
    %v215 = vld [vmem:[#allocation5] sm:$0x3]
    %v216 = vld [vmem:[%s2] sm:$0x3]
    %vm217 = vcmask 261120
    %v219 = vsel %vm217, %v215, 0
    %221 = vmatprep.subr.mxu0 0.0
    %222 = vmatpush1.msra.mxu0 0.0
    %223 = vmatprep.subr.mxu0 0.0
    %224 = vmatpush1.msra.mxu0 0.0
    %225 = vmatprep.subr.mxu0 0.0
    %226 = vmatpush1.msra.mxu0 0.0
    %227 = vmatprep.subr.mxu0 0.0
    %228 = vmatpush1.msra.mxu0 0.0
    %229 = vmatprep.subr.mxu0 0.0
    %230 = vmatpush1.msra.mxu0 0.0
    %231 = vmatprep.subr.mxu0 0.0
    %232 = vmatpush1.msra.mxu0 0.0
    %233 = vmatprep.subr.mxu0 0.0
    %234 = vmatpush1.msra.mxu0 0.0
    %235 = vmatprep.subr.mxu0 0.0
    %236 = vmatpush1.msra.mxu0 0.0
    %237 = vmatprep.subr.mxu0 0.0
    %238 = vmatpush1.msra.mxu0 0.0
    %239 = vmatprep.subr.mxu0 0.0
    %240 = vmatpush1.msra.mxu0 0.0
    %241 = vmatprep.subr.mxu0 0.0
    %242 = vmatpush1.msra.mxu0 0.0
    %243 = vmatprep.subr.mxu0 0.0
    %244 = vmatpush1.msra.mxu0 0.0
    %245 = vmatprep.subr.mxu0 0.0
    %246 = vmatpush1.msra.mxu0 %v121
    %247 = vmatprep.subr.mxu0 0.0
    %248 = vmatpush1.msra.mxu0 %v120
    %249 = vmatprep.subr.mxu0 0.0
    %250 = vmatpush1.msra.mxu0 %v119
    %251 = vmatprep.subr.mxu0 0.0
    %252 = vmatpush1.msra.mxu0 %v118
    %253 = vmatprep.subr.mxu0 0.0
    %254 = vmatpush2.msra.mxu0 0.0
    %255 = vmatprep.subr.mxu0 0.0
    %256 = vmatpush2.msra.mxu0 0.0
    %257 = vmatprep.subr.mxu0 0.0
    %258 = vmatpush2.msra.mxu0 0.0
    %259 = vmatprep.subr.mxu0 0.0
    %260 = vmatpush2.msra.mxu0 0.0
    %261 = vmatprep.subr.mxu0 0.0
    %262 = vmatpush2.msra.mxu0 0.0
    %263 = vmatprep.subr.mxu0 0.0
    %264 = vmatpush2.msra.mxu0 0.0
    %265 = vmatprep.subr.mxu0 0.0
    %266 = vmatpush2.msra.mxu0 0.0
    %267 = vmatprep.subr.mxu0 0.0
    %268 = vmatpush2.msra.mxu0 0.0
    %269 = vmatprep.subr.mxu0 0.0
    %270 = vmatpush2.msra.mxu0 0.0
    %271 = vmatprep.subr.mxu0 0.0
    %272 = vmatpush2.msra.mxu0 0.0
    %273 = vmatprep.subr.mxu0 0.0
    %274 = vmatpush2.msra.mxu0 0.0
    %275 = vmatprep.subr.mxu0 0.0
    %276 = vmatpush2.msra.mxu0 0.0
    %277 = vmatprep.subr.mxu0 0.0
    %278 = vmatpush2.msra.mxu0 0.0
    %279 = vmatprep.subr.mxu0 0.0
    %280 = vmatpush2.msra.mxu0 0.0
    %281 = vmatprep.subr.mxu0 0.0
    %282 = vmatpush2.msra.mxu0 0.0
    %283 = vmatprep.subr.mxu0 0.0
    %284 = vmatpush2.msra.mxu0 0.0
    %285 = vmatprep.mubr.f32.mxu0 0.0
    %286 = vmatmul.mubr.f32.gmra.mxu0 %v219
    %v287 = vpop.f32.mrf.mxu0
    %v288 = vadd.f32 0.0, %v287
    %v289 = vpop.f32.mrf.mxu0
    %290 = vdwg.mxu0
    %v291 = vadd.f32 %v212, %v288
    %v292 = vxor.u32 %v291, 2147483648
    %v293 = vmul.f32 %v292, 1.442695
    %v294 = vpow.pop %v293
    %v295 = vadd.f32 %v294, 1.0
    %v296 = vrcp.pop %v295
    %v297 = vmul.f32 1.0, %v296
    %v298 = vtanh.pop %v291
    %300 = vrot.lane.b32.xlu0 %v216, 32
    %v301 = vpop.permute.xlu0 %300
    %v303 = vmul.f32 %v297, %v301
    %305 = vrot.lane.b32.xlu0 %v298, 64
    %v306 = vpop.permute.xlu0 %305
    %v308 = vmul.f32 %v297, %v306
    %310 = vrot.lane.b32.xlu0 %v308, 32
    %v311 = vpop.permute.xlu0 %310
    %v313 = vadd.f32 %v303, %v311
    %v314 = vtanh.pop %v313
    %316 = vrot.lane.b32.xlu0 %v314, 64
    %v317 = vpop.permute.xlu0 %316
    %v319 = vmul.f32 %v297, %v317
    %321 = vrot.lane.b32.xlu0 %v319, 32
    %v322 = vpop.permute.xlu0 %321
    %v323 = vsel %vm217, %v322, 0
    %325 = vmatprep.subr.mxu0 0.0
    %326 = vmatpush1.msra.mxu0 0.0
    %327 = vmatprep.subr.mxu0 0.0
    %328 = vmatpush1.msra.mxu0 0.0
    %329 = vmatprep.subr.mxu0 0.0
    %330 = vmatpush1.msra.mxu0 0.0
    %331 = vmatprep.subr.mxu0 0.0
    %332 = vmatpush1.msra.mxu0 0.0
    %333 = vmatprep.subr.mxu0 0.0
    %334 = vmatpush1.msra.mxu0 0.0
    %335 = vmatprep.subr.mxu0 0.0
    %336 = vmatpush1.msra.mxu0 0.0
    %337 = vmatprep.subr.mxu0 0.0
    %338 = vmatpush1.msra.mxu0 0.0
    %339 = vmatprep.subr.mxu0 0.0
    %340 = vmatpush1.msra.mxu0 0.0
    %341 = vmatprep.subr.mxu0 0.0
    %342 = vmatpush1.msra.mxu0 0.0
    %343 = vmatprep.subr.mxu0 0.0
    %344 = vmatpush1.msra.mxu0 0.0
    %345 = vmatprep.subr.mxu0 0.0
    %346 = vmatpush1.msra.mxu0 0.0
    %347 = vmatprep.subr.mxu0 0.0
    %348 = vmatpush1.msra.mxu0 0.0
    %349 = vmatprep.subr.mxu0 0.0
    %350 = vmatpush1.msra.mxu0 %v121
    %351 = vmatprep.subr.mxu0 0.0
    %352 = vmatpush1.msra.mxu0 %v120
    %353 = vmatprep.subr.mxu0 0.0
    %354 = vmatpush1.msra.mxu0 %v119
    %355 = vmatprep.subr.mxu0 0.0
    %356 = vmatpush1.msra.mxu0 %v118
    %357 = vmatprep.subr.mxu0 0.0
    %358 = vmatpush2.msra.mxu0 0.0
    %359 = vmatprep.subr.mxu0 0.0
    %360 = vmatpush2.msra.mxu0 0.0
    %361 = vmatprep.subr.mxu0 0.0
    %362 = vmatpush2.msra.mxu0 0.0
    %363 = vmatprep.subr.mxu0 0.0
    %364 = vmatpush2.msra.mxu0 0.0
    %365 = vmatprep.subr.mxu0 0.0
    %366 = vmatpush2.msra.mxu0 0.0
    %367 = vmatprep.subr.mxu0 0.0
    %368 = vmatpush2.msra.mxu0 0.0
    %369 = vmatprep.subr.mxu0 0.0
    %370 = vmatpush2.msra.mxu0 0.0
    %371 = vmatprep.subr.mxu0 0.0
    %372 = vmatpush2.msra.mxu0 0.0
    %373 = vmatprep.subr.mxu0 0.0
    %374 = vmatpush2.msra.mxu0 0.0
    %375 = vmatprep.subr.mxu0 0.0
    %376 = vmatpush2.msra.mxu0 0.0
    %377 = vmatprep.subr.mxu0 0.0
    %378 = vmatpush2.msra.mxu0 0.0
    %379 = vmatprep.subr.mxu0 0.0
    %380 = vmatpush2.msra.mxu0 0.0
    %381 = vmatprep.subr.mxu0 0.0
    %382 = vmatpush2.msra.mxu0 0.0
    %383 = vmatprep.subr.mxu0 0.0
    %384 = vmatpush2.msra.mxu0 0.0
    %385 = vmatprep.subr.mxu0 0.0
    %386 = vmatpush2.msra.mxu0 0.0
    %387 = vmatprep.subr.mxu0 0.0
    %388 = vmatpush2.msra.mxu0 0.0
    %389 = vmatprep.mubr.f32.mxu0 0.0
    %390 = vmatmul.mubr.f32.gmra.mxu0 %v323
    %v391 = vpop.f32.mrf.mxu0
    %v392 = vadd.f32 0.0, %v391
    %v393 = vpop.f32.mrf.mxu0
    %394 = vdwg.mxu0
    %v396 = vrot.slane %v392, 7
    %v398 = vadd.f32 %v212, %v396
    %v399 = vxor.u32 %v398, 2147483648
    %v400 = vmul.f32 %v399, 1.442695
    %v401 = vpow.pop %v400
    %v402 = vadd.f32 %v401, 1.0
    %v403 = vrcp.pop %v402
    %v404 = vmul.f32 1.0, %v403
    %v405 = vtanh.pop %v398
    %v407 = vrot.slane %v313, 7
    %v409 = vmul.f32 %v404, %v407
    %411 = vrot.lane.b32.xlu0 %v405, 64
    %v412 = vpop.permute.xlu0 %411
    %v414 = vmul.f32 %v404, %v412
    %416 = vrot.lane.b32.xlu0 %v414, 32
    %v417 = vpop.permute.xlu0 %416
    %v419 = vadd.f32 %v409, %v417
    %v420 = vtanh.pop %v419
    %422 = vrot.lane.b32.xlu0 %v420, 64
    %v423 = vpop.permute.xlu0 %422
    %v425 = vmul.f32 %v404, %v423
    %v427 = vrot.slane %v215, 1
    %428 = vrot.lane.b32.xlu0 %v427, 32
    %v429 = vpop.permute.xlu0 %428
    %v431 = vsel %vm217, %v322, %v429
    %vm432 = vcmask 523264
    %v434 = vsel %vm432, %v431, 0
    %436 = vmatprep.subr.mxu0 0.0
    %437 = vmatpush1.msra.mxu0 0.0
    %438 = vmatprep.subr.mxu0 0.0
    %439 = vmatpush1.msra.mxu0 0.0
    %440 = vmatprep.subr.mxu0 0.0
    %441 = vmatpush1.msra.mxu0 0.0
    %442 = vmatprep.subr.mxu0 0.0
    %443 = vmatpush1.msra.mxu0 0.0
    %444 = vmatprep.subr.mxu0 0.0
    %445 = vmatpush1.msra.mxu0 0.0
    %446 = vmatprep.subr.mxu0 0.0
    %447 = vmatpush1.msra.mxu0 0.0
    %448 = vmatprep.subr.mxu0 0.0
    %449 = vmatpush1.msra.mxu0 0.0
    %450 = vmatprep.subr.mxu0 0.0
    %451 = vmatpush1.msra.mxu0 0.0
    %452 = vmatprep.subr.mxu0 0.0
    %453 = vmatpush1.msra.mxu0 %v129
    %454 = vmatprep.subr.mxu0 0.0
    %455 = vmatpush1.msra.mxu0 %v128
    %456 = vmatprep.subr.mxu0 0.0
    %457 = vmatpush1.msra.mxu0 %v127
    %458 = vmatprep.subr.mxu0 0.0
    %459 = vmatpush1.msra.mxu0 %v126
    %460 = vmatprep.subr.mxu0 0.0
    %461 = vmatpush1.msra.mxu0 %v125
    %462 = vmatprep.subr.mxu0 0.0
    %463 = vmatpush1.msra.mxu0 %v124
    %464 = vmatprep.subr.mxu0 0.0
    %465 = vmatpush1.msra.mxu0 %v123
    %466 = vmatprep.subr.mxu0 0.0
    %467 = vmatpush1.msra.mxu0 %v122
    %468 = vmatprep.subr.mxu0 0.0
    %469 = vmatpush2.msra.mxu0 0.0
    %470 = vmatprep.subr.mxu0 0.0
    %471 = vmatpush2.msra.mxu0 0.0
    %472 = vmatprep.subr.mxu0 0.0
    %473 = vmatpush2.msra.mxu0 0.0
    %474 = vmatprep.subr.mxu0 0.0
    %475 = vmatpush2.msra.mxu0 0.0
    %476 = vmatprep.subr.mxu0 0.0
    %477 = vmatpush2.msra.mxu0 0.0
    %478 = vmatprep.subr.mxu0 0.0
    %479 = vmatpush2.msra.mxu0 0.0
    %480 = vmatprep.subr.mxu0 0.0
    %481 = vmatpush2.msra.mxu0 0.0
    %482 = vmatprep.subr.mxu0 0.0
    %483 = vmatpush2.msra.mxu0 0.0
    %484 = vmatprep.subr.mxu0 0.0
    %485 = vmatpush2.msra.mxu0 0.0
    %486 = vmatprep.subr.mxu0 0.0
    %487 = vmatpush2.msra.mxu0 0.0
    %488 = vmatprep.subr.mxu0 0.0
    %489 = vmatpush2.msra.mxu0 0.0
    %490 = vmatprep.subr.mxu0 0.0
    %491 = vmatpush2.msra.mxu0 0.0
    %492 = vmatprep.subr.mxu0 0.0
    %493 = vmatpush2.msra.mxu0 0.0
    %494 = vmatprep.subr.mxu0 0.0
    %495 = vmatpush2.msra.mxu0 0.0
    %496 = vmatprep.subr.mxu0 0.0
    %497 = vmatpush2.msra.mxu0 0.0
    %498 = vmatprep.subr.mxu0 0.0
    %499 = vmatpush2.msra.mxu0 0.0
    %500 = vmatprep.mubr.f32.mxu0 0.0
    %501 = vmatmul.mubr.f32.gmra.mxu0 %v434
    %v502 = vpop.f32.mrf.mxu0
    %v503 = vadd.f32 %v130, %v502
    %v504 = vpop.f32.mrf.mxu0
    %505 = vdwg.mxu0
    %v506 = vxor.u32 %v503, 2147483648
    %v507 = vmul.f32 %v506, 1.442695
    %v508 = vpow.pop %v507
    %v509 = vadd.f32 %v508, 1.0
    %v510 = vrcp.pop %v509
    %v511 = vmul.f32 1.0, %v510
    %v512 = vtanh.pop %v503
    %v513 = vrot.slane %v216, 1
    %514 = vrot.lane.b32.xlu0 %v513, 32
    %v515 = vpop.permute.xlu0 %514
    %v517 = vmul.f32 %v511, %v515
    %519 = vrot.lane.b32.xlu0 %v512, 64
    %v520 = vpop.permute.xlu0 %519
    %v522 = vmul.f32 %v511, %v520
    %524 = vrot.lane.b32.xlu0 %v522, 32
    %v525 = vpop.permute.xlu0 %524
    %v527 = vadd.f32 %v517, %v525
    %v528 = vtanh.pop %v527
    %530 = vrot.lane.b32.xlu0 %v528, 64
    %v531 = vpop.permute.xlu0 %530
    %v533 = vmul.f32 %v511, %v531
    %v535 = vrot.slane %v425, 1
    %536 = vrot.lane.b32.xlu0 %v535, 32
    %v537 = vpop.permute.xlu0 %536
    %v538 = vsel %vm217, %v537, 0
    %540 = vmatprep.subr.mxu0 0.0
    %541 = vmatpush1.msra.mxu0 0.0
    %542 = vmatprep.subr.mxu0 0.0
    %543 = vmatpush1.msra.mxu0 0.0
    %544 = vmatprep.subr.mxu0 0.0
    %545 = vmatpush1.msra.mxu0 0.0
    %546 = vmatprep.subr.mxu0 0.0
    %547 = vmatpush1.msra.mxu0 0.0
    %548 = vmatprep.subr.mxu0 0.0
    %549 = vmatpush1.msra.mxu0 0.0
    %550 = vmatprep.subr.mxu0 0.0
    %551 = vmatpush1.msra.mxu0 0.0
    %552 = vmatprep.subr.mxu0 0.0
    %553 = vmatpush1.msra.mxu0 0.0
    %554 = vmatprep.subr.mxu0 0.0
    %555 = vmatpush1.msra.mxu0 0.0
    %556 = vmatprep.subr.mxu0 0.0
    %557 = vmatpush1.msra.mxu0 0.0
    %558 = vmatprep.subr.mxu0 0.0
    %559 = vmatpush1.msra.mxu0 0.0
    %560 = vmatprep.subr.mxu0 0.0
    %561 = vmatpush1.msra.mxu0 0.0
    %562 = vmatprep.subr.mxu0 0.0
    %563 = vmatpush1.msra.mxu0 0.0
    %564 = vmatprep.subr.mxu0 0.0
    %565 = vmatpush1.msra.mxu0 %v121
    %566 = vmatprep.subr.mxu0 0.0
    %567 = vmatpush1.msra.mxu0 %v120
    %568 = vmatprep.subr.mxu0 0.0
    %569 = vmatpush1.msra.mxu0 %v119
    %570 = vmatprep.subr.mxu0 0.0
    %571 = vmatpush1.msra.mxu0 %v118
    %572 = vmatprep.subr.mxu0 0.0
    %573 = vmatpush2.msra.mxu0 0.0
    %574 = vmatprep.subr.mxu0 0.0
    %575 = vmatpush2.msra.mxu0 0.0
    %576 = vmatprep.subr.mxu0 0.0
    %577 = vmatpush2.msra.mxu0 0.0
    %578 = vmatprep.subr.mxu0 0.0
    %579 = vmatpush2.msra.mxu0 0.0
    %580 = vmatprep.subr.mxu0 0.0
    %581 = vmatpush2.msra.mxu0 0.0
    %582 = vmatprep.subr.mxu0 0.0
    %583 = vmatpush2.msra.mxu0 0.0
    %584 = vmatprep.subr.mxu0 0.0
    %585 = vmatpush2.msra.mxu0 0.0
    %586 = vmatprep.subr.mxu0 0.0
    %587 = vmatpush2.msra.mxu0 0.0
    %588 = vmatprep.subr.mxu0 0.0
    %589 = vmatpush2.msra.mxu0 0.0
    %590 = vmatprep.subr.mxu0 0.0
    %591 = vmatpush2.msra.mxu0 0.0
    %592 = vmatprep.subr.mxu0 0.0
    %593 = vmatpush2.msra.mxu0 0.0
    %594 = vmatprep.subr.mxu0 0.0
    %595 = vmatpush2.msra.mxu0 0.0
    %596 = vmatprep.subr.mxu0 0.0
    %597 = vmatpush2.msra.mxu0 0.0
    %598 = vmatprep.subr.mxu0 0.0
    %599 = vmatpush2.msra.mxu0 0.0
    %600 = vmatprep.subr.mxu0 0.0
    %601 = vmatpush2.msra.mxu0 0.0
    %602 = vmatprep.subr.mxu0 0.0
    %603 = vmatpush2.msra.mxu0 0.0
    %604 = vmatprep.mubr.f32.mxu0 0.0
    %605 = vmatmul.mubr.f32.gmra.mxu0 %v538
    %v606 = vpop.f32.mrf.mxu0
    %v607 = vadd.f32 0.0, %v606
    %v608 = vpop.f32.mrf.mxu0
    %609 = vdwg.mxu0
    %v611 = vrot.slane %v607, 6
    %v613 = vadd.f32 %v212, %v611
    %v614 = vxor.u32 %v613, 2147483648
    %v615 = vmul.f32 %v614, 1.442695
    %v616 = vpow.pop %v615
    %v617 = vadd.f32 %v616, 1.0
    %v618 = vrcp.pop %v617
    %v619 = vmul.f32 1.0, %v618
    %v620 = vtanh.pop %v613
    %v622 = vrot.slane %v419, 7
    %v624 = vmul.f32 %v619, %v622
    %626 = vrot.lane.b32.xlu0 %v620, 64
    %v627 = vpop.permute.xlu0 %626
    %v629 = vmul.f32 %v619, %v627
    %631 = vrot.lane.b32.xlu0 %v629, 32
    %v632 = vpop.permute.xlu0 %631
    %v634 = vadd.f32 %v624, %v632
    %v635 = vtanh.pop %v634
    %637 = vrot.lane.b32.xlu0 %v635, 64
    %v638 = vpop.permute.xlu0 %637
    %v640 = vmul.f32 %v619, %v638
    %641 = vrot.lane.b32.xlu0 %v425, 32
    %v642 = vpop.permute.xlu0 %641
    %v645 = vrot.slane %v533, 7
    %646 = vrot.lane.b32.xlu0 %v645, 64
    %v647 = vpop.permute.xlu0 %646
    %v649 = vsel %vm217, %v642, %v647
    %v651 = vrot.slane %v649, 1
    %v652 = vsel %vm432, %v651, 0
    %654 = vmatprep.subr.mxu0 0.0
    %655 = vmatpush1.msra.mxu0 0.0
    %656 = vmatprep.subr.mxu0 0.0
    %657 = vmatpush1.msra.mxu0 0.0
    %658 = vmatprep.subr.mxu0 0.0
    %659 = vmatpush1.msra.mxu0 0.0
    %660 = vmatprep.subr.mxu0 0.0
    %661 = vmatpush1.msra.mxu0 0.0
    %662 = vmatprep.subr.mxu0 0.0
    %663 = vmatpush1.msra.mxu0 0.0
    %664 = vmatprep.subr.mxu0 0.0
    %665 = vmatpush1.msra.mxu0 0.0
    %666 = vmatprep.subr.mxu0 0.0
    %667 = vmatpush1.msra.mxu0 0.0
    %668 = vmatprep.subr.mxu0 0.0
    %669 = vmatpush1.msra.mxu0 0.0
    %670 = vmatprep.subr.mxu0 0.0
    %671 = vmatpush1.msra.mxu0 %v129
    %672 = vmatprep.subr.mxu0 0.0
    %673 = vmatpush1.msra.mxu0 %v128
    %674 = vmatprep.subr.mxu0 0.0
    %675 = vmatpush1.msra.mxu0 %v127
    %676 = vmatprep.subr.mxu0 0.0
    %677 = vmatpush1.msra.mxu0 %v126
    %678 = vmatprep.subr.mxu0 0.0
    %679 = vmatpush1.msra.mxu0 %v125
    %680 = vmatprep.subr.mxu0 0.0
    %681 = vmatpush1.msra.mxu0 %v124
    %682 = vmatprep.subr.mxu0 0.0
    %683 = vmatpush1.msra.mxu0 %v123
    %684 = vmatprep.subr.mxu0 0.0
    %685 = vmatpush1.msra.mxu0 %v122
    %686 = vmatprep.subr.mxu0 0.0
    %687 = vmatpush2.msra.mxu0 0.0
    %688 = vmatprep.subr.mxu0 0.0
    %689 = vmatpush2.msra.mxu0 0.0
    %690 = vmatprep.subr.mxu0 0.0
    %691 = vmatpush2.msra.mxu0 0.0
    %692 = vmatprep.subr.mxu0 0.0
    %693 = vmatpush2.msra.mxu0 0.0
    %694 = vmatprep.subr.mxu0 0.0
    %695 = vmatpush2.msra.mxu0 0.0
    %696 = vmatprep.subr.mxu0 0.0
    %697 = vmatpush2.msra.mxu0 0.0
    %698 = vmatprep.subr.mxu0 0.0
    %699 = vmatpush2.msra.mxu0 0.0
    %700 = vmatprep.subr.mxu0 0.0
    %701 = vmatpush2.msra.mxu0 0.0
    %702 = vmatprep.subr.mxu0 0.0
    %703 = vmatpush2.msra.mxu0 0.0
    %704 = vmatprep.subr.mxu0 0.0
    %705 = vmatpush2.msra.mxu0 0.0
    %706 = vmatprep.subr.mxu0 0.0
    %707 = vmatpush2.msra.mxu0 0.0
    %708 = vmatprep.subr.mxu0 0.0
    %709 = vmatpush2.msra.mxu0 0.0
    %710 = vmatprep.subr.mxu0 0.0
    %711 = vmatpush2.msra.mxu0 0.0
    %712 = vmatprep.subr.mxu0 0.0
    %713 = vmatpush2.msra.mxu0 0.0
    %714 = vmatprep.subr.mxu0 0.0
    %715 = vmatpush2.msra.mxu0 0.0
    %716 = vmatprep.subr.mxu0 0.0
    %717 = vmatpush2.msra.mxu0 0.0
    %718 = vmatprep.mubr.f32.mxu0 0.0
    %719 = vmatmul.mubr.f32.gmra.mxu0 %v652
    %v720 = vpop.f32.mrf.mxu0
    %v721 = vadd.f32 %v130, %v720
    %v722 = vpop.f32.mrf.mxu0
    %723 = vdwg.mxu0
    %v724 = vxor.u32 %v721, 2147483648
    %v725 = vmul.f32 %v724, 1.442695
    %v726 = vpow.pop %v725
    %v727 = vadd.f32 %v726, 1.0
    %v728 = vrcp.pop %v727
    %v729 = vmul.f32 1.0, %v728
    %v730 = vtanh.pop %v721
    %v731 = vmul.f32 %v729, %v527
    %733 = vrot.lane.b32.xlu0 %v730, 64
    %v734 = vpop.permute.xlu0 %733
    %v736 = vmul.f32 %v729, %v734
    %738 = vrot.lane.b32.xlu0 %v736, 32
    %v739 = vpop.permute.xlu0 %738
    %v741 = vadd.f32 %v731, %v739
    %v742 = vtanh.pop %v741
    %744 = vrot.lane.b32.xlu0 %v742, 64
    %v745 = vpop.permute.xlu0 %744
    %v747 = vmul.f32 %v729, %v745
    %v749 = vrot.slane %v640, 2
    %750 = vrot.lane.b32.xlu0 %v749, 32
    %v751 = vpop.permute.xlu0 %750
    %v752 = vsel %vm217, %v751, 0
    %754 = vmatprep.subr.mxu0 0.0
    %755 = vmatpush1.msra.mxu0 0.0
    %756 = vmatprep.subr.mxu0 0.0
    %757 = vmatpush1.msra.mxu0 0.0
    %758 = vmatprep.subr.mxu0 0.0
    %759 = vmatpush1.msra.mxu0 0.0
    %760 = vmatprep.subr.mxu0 0.0
    %761 = vmatpush1.msra.mxu0 0.0
    %762 = vmatprep.subr.mxu0 0.0
    %763 = vmatpush1.msra.mxu0 0.0
    %764 = vmatprep.subr.mxu0 0.0
    %765 = vmatpush1.msra.mxu0 0.0
    %766 = vmatprep.subr.mxu0 0.0
    %767 = vmatpush1.msra.mxu0 0.0
    %768 = vmatprep.subr.mxu0 0.0
    %769 = vmatpush1.msra.mxu0 0.0
    %770 = vmatprep.subr.mxu0 0.0
    %771 = vmatpush1.msra.mxu0 0.0
    %772 = vmatprep.subr.mxu0 0.0
    %773 = vmatpush1.msra.mxu0 0.0
    %774 = vmatprep.subr.mxu0 0.0
    %775 = vmatpush1.msra.mxu0 0.0
    %776 = vmatprep.subr.mxu0 0.0
    %777 = vmatpush1.msra.mxu0 0.0
    %778 = vmatprep.subr.mxu0 0.0
    %779 = vmatpush1.msra.mxu0 %v121
    %780 = vmatprep.subr.mxu0 0.0
    %781 = vmatpush1.msra.mxu0 %v120
    %782 = vmatprep.subr.mxu0 0.0
    %783 = vmatpush1.msra.mxu0 %v119
    %784 = vmatprep.subr.mxu0 0.0
    %785 = vmatpush1.msra.mxu0 %v118
    %786 = vmatprep.subr.mxu0 0.0
    %787 = vmatpush2.msra.mxu0 0.0
    %788 = vmatprep.subr.mxu0 0.0
    %789 = vmatpush2.msra.mxu0 0.0
    %790 = vmatprep.subr.mxu0 0.0
    %791 = vmatpush2.msra.mxu0 0.0
    %792 = vmatprep.subr.mxu0 0.0
    %793 = vmatpush2.msra.mxu0 0.0
    %794 = vmatprep.subr.mxu0 0.0
    %795 = vmatpush2.msra.mxu0 0.0
    %796 = vmatprep.subr.mxu0 0.0
    %797 = vmatpush2.msra.mxu0 0.0
    %798 = vmatprep.subr.mxu0 0.0
    %799 = vmatpush2.msra.mxu0 0.0
    %800 = vmatprep.subr.mxu0 0.0
    %801 = vmatpush2.msra.mxu0 0.0
    %802 = vmatprep.subr.mxu0 0.0
    %803 = vmatpush2.msra.mxu0 0.0
    %804 = vmatprep.subr.mxu0 0.0
    %805 = vmatpush2.msra.mxu0 0.0
    %806 = vmatprep.subr.mxu0 0.0
    %807 = vmatpush2.msra.mxu0 0.0
    %808 = vmatprep.subr.mxu0 0.0
    %809 = vmatpush2.msra.mxu0 0.0
    %810 = vmatprep.subr.mxu0 0.0
    %811 = vmatpush2.msra.mxu0 0.0
    %812 = vmatprep.subr.mxu0 0.0
    %813 = vmatpush2.msra.mxu0 0.0
    %814 = vmatprep.subr.mxu0 0.0
    %815 = vmatpush2.msra.mxu0 0.0
    %816 = vmatprep.subr.mxu0 0.0
    %817 = vmatpush2.msra.mxu0 0.0
    %818 = vmatprep.mubr.f32.mxu0 0.0
    %819 = vmatmul.mubr.f32.gmra.mxu0 %v752
    %v820 = vpop.f32.mrf.mxu0
    %v821 = vadd.f32 0.0, %v820
    %v822 = vpop.f32.mrf.mxu0
    %823 = vdwg.mxu0
    %v825 = vrot.slane %v821, 5
    %v827 = vadd.f32 %v212, %v825
    %v828 = vxor.u32 %v827, 2147483648
    %v829 = vmul.f32 %v828, 1.442695
    %v830 = vpow.pop %v829
    %v831 = vadd.f32 %v830, 1.0
    %v832 = vrcp.pop %v831
    %v833 = vmul.f32 1.0, %v832
    %v834 = vtanh.pop %v827
    %v836 = vrot.slane %v634, 7
    %v838 = vmul.f32 %v833, %v836
    %840 = vrot.lane.b32.xlu0 %v834, 64
    %v841 = vpop.permute.xlu0 %840
    %v843 = vmul.f32 %v833, %v841
    %845 = vrot.lane.b32.xlu0 %v843, 32
    %v846 = vpop.permute.xlu0 %845
    %v848 = vadd.f32 %v838, %v846
    %v849 = vtanh.pop %v848
    %851 = vrot.lane.b32.xlu0 %v849, 64
    %v852 = vpop.permute.xlu0 %851
    %v854 = vmul.f32 %v833, %v852
    %855 = vrot.lane.b32.xlu0 %v640, 32
    %v856 = vpop.permute.xlu0 %855
    %v859 = vrot.slane %v747, 6
    %860 = vrot.lane.b32.xlu0 %v859, 64
    %v861 = vpop.permute.xlu0 %860
    %v863 = vsel %vm217, %v856, %v861
    %v865 = vrot.slane %v863, 2
    %v866 = vsel %vm432, %v865, 0
    %868 = vmatprep.subr.mxu0 0.0
    %869 = vmatpush1.msra.mxu0 0.0
    %870 = vmatprep.subr.mxu0 0.0
    %871 = vmatpush1.msra.mxu0 0.0
    %872 = vmatprep.subr.mxu0 0.0
    %873 = vmatpush1.msra.mxu0 0.0
    %874 = vmatprep.subr.mxu0 0.0
    %875 = vmatpush1.msra.mxu0 0.0
    %876 = vmatprep.subr.mxu0 0.0
    %877 = vmatpush1.msra.mxu0 0.0
    %878 = vmatprep.subr.mxu0 0.0
    %879 = vmatpush1.msra.mxu0 0.0
    %880 = vmatprep.subr.mxu0 0.0
    %881 = vmatpush1.msra.mxu0 0.0
    %882 = vmatprep.subr.mxu0 0.0
    %883 = vmatpush1.msra.mxu0 0.0
    %884 = vmatprep.subr.mxu0 0.0
    %885 = vmatpush1.msra.mxu0 %v129
    %886 = vmatprep.subr.mxu0 0.0
    %887 = vmatpush1.msra.mxu0 %v128
    %888 = vmatprep.subr.mxu0 0.0
    %889 = vmatpush1.msra.mxu0 %v127
    %890 = vmatprep.subr.mxu0 0.0
    %891 = vmatpush1.msra.mxu0 %v126
    %892 = vmatprep.subr.mxu0 0.0
    %893 = vmatpush1.msra.mxu0 %v125
    %894 = vmatprep.subr.mxu0 0.0
    %895 = vmatpush1.msra.mxu0 %v124
    %896 = vmatprep.subr.mxu0 0.0
    %897 = vmatpush1.msra.mxu0 %v123
    %898 = vmatprep.subr.mxu0 0.0
    %899 = vmatpush1.msra.mxu0 %v122
    %900 = vmatprep.subr.mxu0 0.0
    %901 = vmatpush2.msra.mxu0 0.0
    %902 = vmatprep.subr.mxu0 0.0
    %903 = vmatpush2.msra.mxu0 0.0
    %904 = vmatprep.subr.mxu0 0.0
    %905 = vmatpush2.msra.mxu0 0.0
    %906 = vmatprep.subr.mxu0 0.0
    %907 = vmatpush2.msra.mxu0 0.0
    %908 = vmatprep.subr.mxu0 0.0
    %909 = vmatpush2.msra.mxu0 0.0
    %910 = vmatprep.subr.mxu0 0.0
    %911 = vmatpush2.msra.mxu0 0.0
    %912 = vmatprep.subr.mxu0 0.0
    %913 = vmatpush2.msra.mxu0 0.0
    %914 = vmatprep.subr.mxu0 0.0
    %915 = vmatpush2.msra.mxu0 0.0
    %916 = vmatprep.subr.mxu0 0.0
    %917 = vmatpush2.msra.mxu0 0.0
    %918 = vmatprep.subr.mxu0 0.0
    %919 = vmatpush2.msra.mxu0 0.0
    %920 = vmatprep.subr.mxu0 0.0
    %921 = vmatpush2.msra.mxu0 0.0
    %922 = vmatprep.subr.mxu0 0.0
    %923 = vmatpush2.msra.mxu0 0.0
    %924 = vmatprep.subr.mxu0 0.0
    %925 = vmatpush2.msra.mxu0 0.0
    %926 = vmatprep.subr.mxu0 0.0
    %927 = vmatpush2.msra.mxu0 0.0
    %928 = vmatprep.subr.mxu0 0.0
    %929 = vmatpush2.msra.mxu0 0.0
    %930 = vmatprep.subr.mxu0 0.0
    %931 = vmatpush2.msra.mxu0 0.0
    %932 = vmatprep.mubr.f32.mxu0 0.0
    %933 = vmatmul.mubr.f32.gmra.mxu0 %v866
    %v934 = vpop.f32.mrf.mxu0
    %v935 = vadd.f32 %v130, %v934
    %v936 = vpop.f32.mrf.mxu0
    %937 = vdwg.mxu0
    %v938 = vxor.u32 %v935, 2147483648
    %v939 = vmul.f32 %v938, 1.442695
    %v940 = vpow.pop %v939
    %v941 = vadd.f32 %v940, 1.0
    %v942 = vrcp.pop %v941
    %v943 = vmul.f32 1.0, %v942
    %v944 = vtanh.pop %v935
    %v945 = vmul.f32 %v943, %v741
    %947 = vrot.lane.b32.xlu0 %v944, 64
    %v948 = vpop.permute.xlu0 %947
    %v950 = vmul.f32 %v943, %v948
    %952 = vrot.lane.b32.xlu0 %v950, 32
    %v953 = vpop.permute.xlu0 %952
    %v955 = vadd.f32 %v945, %v953
    %v956 = vtanh.pop %v955
    %958 = vrot.lane.b32.xlu0 %v956, 64
    %v959 = vpop.permute.xlu0 %958
    %v961 = vmul.f32 %v943, %v959
    %v963 = vrot.slane %v854, 3
    %964 = vrot.lane.b32.xlu0 %v963, 32
    %v965 = vpop.permute.xlu0 %964
    %v966 = vsel %vm217, %v965, 0
    %968 = vmatprep.subr.mxu0 0.0
    %969 = vmatpush1.msra.mxu0 0.0
    %970 = vmatprep.subr.mxu0 0.0
    %971 = vmatpush1.msra.mxu0 0.0
    %972 = vmatprep.subr.mxu0 0.0
    %973 = vmatpush1.msra.mxu0 0.0
    %974 = vmatprep.subr.mxu0 0.0
    %975 = vmatpush1.msra.mxu0 0.0
    %976 = vmatprep.subr.mxu0 0.0
    %977 = vmatpush1.msra.mxu0 0.0
    %978 = vmatprep.subr.mxu0 0.0
    %979 = vmatpush1.msra.mxu0 0.0
    %980 = vmatprep.subr.mxu0 0.0
    %981 = vmatpush1.msra.mxu0 0.0
    %982 = vmatprep.subr.mxu0 0.0
    %983 = vmatpush1.msra.mxu0 0.0
    %984 = vmatprep.subr.mxu0 0.0
    %985 = vmatpush1.msra.mxu0 0.0
    %986 = vmatprep.subr.mxu0 0.0
    %987 = vmatpush1.msra.mxu0 0.0
    %988 = vmatprep.subr.mxu0 0.0
    %989 = vmatpush1.msra.mxu0 0.0
    %990 = vmatprep.subr.mxu0 0.0
    %991 = vmatpush1.msra.mxu0 0.0
    %992 = vmatprep.subr.mxu0 0.0
    %993 = vmatpush1.msra.mxu0 %v121
    %994 = vmatprep.subr.mxu0 0.0
    %995 = vmatpush1.msra.mxu0 %v120
    %996 = vmatprep.subr.mxu0 0.0
    %997 = vmatpush1.msra.mxu0 %v119
    %998 = vmatprep.subr.mxu0 0.0
    %999 = vmatpush1.msra.mxu0 %v118
    %1000 = vmatprep.subr.mxu0 0.0
    %1001 = vmatpush2.msra.mxu0 0.0
    %1002 = vmatprep.subr.mxu0 0.0
    %1003 = vmatpush2.msra.mxu0 0.0
    %1004 = vmatprep.subr.mxu0 0.0
    %1005 = vmatpush2.msra.mxu0 0.0
    %1006 = vmatprep.subr.mxu0 0.0
    %1007 = vmatpush2.msra.mxu0 0.0
    %1008 = vmatprep.subr.mxu0 0.0
    %1009 = vmatpush2.msra.mxu0 0.0
    %1010 = vmatprep.subr.mxu0 0.0
    %1011 = vmatpush2.msra.mxu0 0.0
    %1012 = vmatprep.subr.mxu0 0.0
    %1013 = vmatpush2.msra.mxu0 0.0
    %1014 = vmatprep.subr.mxu0 0.0
    %1015 = vmatpush2.msra.mxu0 0.0
    %1016 = vmatprep.subr.mxu0 0.0
    %1017 = vmatpush2.msra.mxu0 0.0
    %1018 = vmatprep.subr.mxu0 0.0
    %1019 = vmatpush2.msra.mxu0 0.0
    %1020 = vmatprep.subr.mxu0 0.0
    %1021 = vmatpush2.msra.mxu0 0.0
    %1022 = vmatprep.subr.mxu0 0.0
    %1023 = vmatpush2.msra.mxu0 0.0
    %1024 = vmatprep.subr.mxu0 0.0
    %1025 = vmatpush2.msra.mxu0 0.0
    %1026 = vmatprep.subr.mxu0 0.0
    %1027 = vmatpush2.msra.mxu0 0.0
    %1028 = vmatprep.subr.mxu0 0.0
    %1029 = vmatpush2.msra.mxu0 0.0
    %1030 = vmatprep.subr.mxu0 0.0
    %1031 = vmatpush2.msra.mxu0 0.0
    %1032 = vmatprep.mubr.f32.mxu0 0.0
    %1033 = vmatmul.mubr.f32.gmra.mxu0 %v966
    %v1034 = vpop.f32.mrf.mxu0
    %v1035 = vadd.f32 0.0, %v1034
    %v1036 = vpop.f32.mrf.mxu0
    %1037 = vdwg.mxu0
    %v1039 = vrot.slane %v1035, 4
    %v1041 = vadd.f32 %v212, %v1039
    %v1042 = vxor.u32 %v1041, 2147483648
    %v1043 = vmul.f32 %v1042, 1.442695
    %v1044 = vpow.pop %v1043
    %v1045 = vadd.f32 %v1044, 1.0
    %v1046 = vrcp.pop %v1045
    %v1047 = vmul.f32 1.0, %v1046
    %v1048 = vtanh.pop %v1041
    %v1050 = vrot.slane %v848, 7
    %v1052 = vmul.f32 %v1047, %v1050
    %1054 = vrot.lane.b32.xlu0 %v1048, 64
    %v1055 = vpop.permute.xlu0 %1054
    %v1057 = vmul.f32 %v1047, %v1055
    %1059 = vrot.lane.b32.xlu0 %v1057, 32
    %v1060 = vpop.permute.xlu0 %1059
    %v1062 = vadd.f32 %v1052, %v1060
    %v1063 = vtanh.pop %v1062
    %1065 = vrot.lane.b32.xlu0 %v1063, 64
    %v1066 = vpop.permute.xlu0 %1065
    %v1068 = vmul.f32 %v1047, %v1066
    %1069 = vrot.lane.b32.xlu0 %v854, 32
    %v1070 = vpop.permute.xlu0 %1069
    %v1073 = vrot.slane %v961, 5
    %1074 = vrot.lane.b32.xlu0 %v1073, 64
    %v1075 = vpop.permute.xlu0 %1074
    %v1077 = vsel %vm217, %v1070, %v1075
    %v1079 = vrot.slane %v1077, 3
    %v1080 = vsel %vm432, %v1079, 0
    %1082 = vmatprep.subr.mxu0 0.0
    %1083 = vmatpush1.msra.mxu0 0.0
    %1084 = vmatprep.subr.mxu0 0.0
    %1085 = vmatpush1.msra.mxu0 0.0
    %1086 = vmatprep.subr.mxu0 0.0
    %1087 = vmatpush1.msra.mxu0 0.0
    %1088 = vmatprep.subr.mxu0 0.0
    %1089 = vmatpush1.msra.mxu0 0.0
    %1090 = vmatprep.subr.mxu0 0.0
    %1091 = vmatpush1.msra.mxu0 0.0
    %1092 = vmatprep.subr.mxu0 0.0
    %1093 = vmatpush1.msra.mxu0 0.0
    %1094 = vmatprep.subr.mxu0 0.0
    %1095 = vmatpush1.msra.mxu0 0.0
    %1096 = vmatprep.subr.mxu0 0.0
    %1097 = vmatpush1.msra.mxu0 0.0
    %1098 = vmatprep.subr.mxu0 0.0
    %1099 = vmatpush1.msra.mxu0 %v129
    %1100 = vmatprep.subr.mxu0 0.0
    %1101 = vmatpush1.msra.mxu0 %v128
    %1102 = vmatprep.subr.mxu0 0.0
    %1103 = vmatpush1.msra.mxu0 %v127
    %1104 = vmatprep.subr.mxu0 0.0
    %1105 = vmatpush1.msra.mxu0 %v126
    %1106 = vmatprep.subr.mxu0 0.0
    %1107 = vmatpush1.msra.mxu0 %v125
    %1108 = vmatprep.subr.mxu0 0.0
    %1109 = vmatpush1.msra.mxu0 %v124
    %1110 = vmatprep.subr.mxu0 0.0
    %1111 = vmatpush1.msra.mxu0 %v123
    %1112 = vmatprep.subr.mxu0 0.0
    %1113 = vmatpush1.msra.mxu0 %v122
    %1114 = vmatprep.subr.mxu0 0.0
    %1115 = vmatpush2.msra.mxu0 0.0
    %1116 = vmatprep.subr.mxu0 0.0
    %1117 = vmatpush2.msra.mxu0 0.0
    %1118 = vmatprep.subr.mxu0 0.0
    %1119 = vmatpush2.msra.mxu0 0.0
    %1120 = vmatprep.subr.mxu0 0.0
    %1121 = vmatpush2.msra.mxu0 0.0
    %1122 = vmatprep.subr.mxu0 0.0
    %1123 = vmatpush2.msra.mxu0 0.0
    %1124 = vmatprep.subr.mxu0 0.0
    %1125 = vmatpush2.msra.mxu0 0.0
    %1126 = vmatprep.subr.mxu0 0.0
    %1127 = vmatpush2.msra.mxu0 0.0
    %1128 = vmatprep.subr.mxu0 0.0
    %1129 = vmatpush2.msra.mxu0 0.0
    %1130 = vmatprep.subr.mxu0 0.0
    %1131 = vmatpush2.msra.mxu0 0.0
    %1132 = vmatprep.subr.mxu0 0.0
    %1133 = vmatpush2.msra.mxu0 0.0
    %1134 = vmatprep.subr.mxu0 0.0
    %1135 = vmatpush2.msra.mxu0 0.0
    %1136 = vmatprep.subr.mxu0 0.0
    %1137 = vmatpush2.msra.mxu0 0.0
    %1138 = vmatprep.subr.mxu0 0.0
    %1139 = vmatpush2.msra.mxu0 0.0
    %1140 = vmatprep.subr.mxu0 0.0
    %1141 = vmatpush2.msra.mxu0 0.0
    %1142 = vmatprep.subr.mxu0 0.0
    %1143 = vmatpush2.msra.mxu0 0.0
    %1144 = vmatprep.subr.mxu0 0.0
    %1145 = vmatpush2.msra.mxu0 0.0
    %1146 = vmatprep.mubr.f32.mxu0 0.0
    %1147 = vmatmul.mubr.f32.gmra.mxu0 %v1080
    %v1148 = vpop.f32.mrf.mxu0
    %v1149 = vadd.f32 %v130, %v1148
    %v1150 = vpop.f32.mrf.mxu0
    %1151 = vdwg.mxu0
    %v1152 = vxor.u32 %v1149, 2147483648
    %v1153 = vmul.f32 %v1152, 1.442695
    %v1154 = vpow.pop %v1153
    %v1155 = vadd.f32 %v1154, 1.0
    %v1156 = vrcp.pop %v1155
    %v1157 = vmul.f32 1.0, %v1156
    %v1158 = vtanh.pop %v1149
    %v1159 = vmul.f32 %v1157, %v955
    %1161 = vrot.lane.b32.xlu0 %v1158, 64
    %v1162 = vpop.permute.xlu0 %1161
    %v1164 = vmul.f32 %v1157, %v1162
    %1166 = vrot.lane.b32.xlu0 %v1164, 32
    %v1167 = vpop.permute.xlu0 %1166
    %v1169 = vadd.f32 %v1159, %v1167
    %v1170 = vtanh.pop %v1169
    %1172 = vrot.lane.b32.xlu0 %v1170, 64
    %v1173 = vpop.permute.xlu0 %1172
    %v1175 = vmul.f32 %v1157, %v1173
    %v1177 = vrot.slane %v1068, 4
    %1178 = vrot.lane.b32.xlu0 %v1177, 32
    %v1179 = vpop.permute.xlu0 %1178
    %v1180 = vsel %vm217, %v1179, 0
    %1182 = vmatprep.subr.mxu0 0.0
    %1183 = vmatpush1.msra.mxu0 0.0
    %1184 = vmatprep.subr.mxu0 0.0
    %1185 = vmatpush1.msra.mxu0 0.0
    %1186 = vmatprep.subr.mxu0 0.0
    %1187 = vmatpush1.msra.mxu0 0.0
    %1188 = vmatprep.subr.mxu0 0.0
    %1189 = vmatpush1.msra.mxu0 0.0
    %1190 = vmatprep.subr.mxu0 0.0
    %1191 = vmatpush1.msra.mxu0 0.0
    %1192 = vmatprep.subr.mxu0 0.0
    %1193 = vmatpush1.msra.mxu0 0.0
    %1194 = vmatprep.subr.mxu0 0.0
    %1195 = vmatpush1.msra.mxu0 0.0
    %1196 = vmatprep.subr.mxu0 0.0
    %1197 = vmatpush1.msra.mxu0 0.0
    %1198 = vmatprep.subr.mxu0 0.0
    %1199 = vmatpush1.msra.mxu0 0.0
    %1200 = vmatprep.subr.mxu0 0.0
    %1201 = vmatpush1.msra.mxu0 0.0
    %1202 = vmatprep.subr.mxu0 0.0
    %1203 = vmatpush1.msra.mxu0 0.0
    %1204 = vmatprep.subr.mxu0 0.0
    %1205 = vmatpush1.msra.mxu0 0.0
    %1206 = vmatprep.subr.mxu0 0.0
    %1207 = vmatpush1.msra.mxu0 %v121
    %1208 = vmatprep.subr.mxu0 0.0
    %1209 = vmatpush1.msra.mxu0 %v120
    %1210 = vmatprep.subr.mxu0 0.0
    %1211 = vmatpush1.msra.mxu0 %v119
    %1212 = vmatprep.subr.mxu0 0.0
    %1213 = vmatpush1.msra.mxu0 %v118
    %1214 = vmatprep.subr.mxu0 0.0
    %1215 = vmatpush2.msra.mxu0 0.0
    %1216 = vmatprep.subr.mxu0 0.0
    %1217 = vmatpush2.msra.mxu0 0.0
    %1218 = vmatprep.subr.mxu0 0.0
    %1219 = vmatpush2.msra.mxu0 0.0
    %1220 = vmatprep.subr.mxu0 0.0
    %1221 = vmatpush2.msra.mxu0 0.0
    %1222 = vmatprep.subr.mxu0 0.0
    %1223 = vmatpush2.msra.mxu0 0.0
    %1224 = vmatprep.subr.mxu0 0.0
    %1225 = vmatpush2.msra.mxu0 0.0
    %1226 = vmatprep.subr.mxu0 0.0
    %1227 = vmatpush2.msra.mxu0 0.0
    %1228 = vmatprep.subr.mxu0 0.0
    %1229 = vmatpush2.msra.mxu0 0.0
    %1230 = vmatprep.subr.mxu0 0.0
    %1231 = vmatpush2.msra.mxu0 0.0
    %1232 = vmatprep.subr.mxu0 0.0
    %1233 = vmatpush2.msra.mxu0 0.0
    %1234 = vmatprep.subr.mxu0 0.0
    %1235 = vmatpush2.msra.mxu0 0.0
    %1236 = vmatprep.subr.mxu0 0.0
    %1237 = vmatpush2.msra.mxu0 0.0
    %1238 = vmatprep.subr.mxu0 0.0
    %1239 = vmatpush2.msra.mxu0 0.0
    %1240 = vmatprep.subr.mxu0 0.0
    %1241 = vmatpush2.msra.mxu0 0.0
    %1242 = vmatprep.subr.mxu0 0.0
    %1243 = vmatpush2.msra.mxu0 0.0
    %1244 = vmatprep.subr.mxu0 0.0
    %1245 = vmatpush2.msra.mxu0 0.0
    %1246 = vmatprep.mubr.f32.mxu0 0.0
    %1247 = vmatmul.mubr.f32.gmra.mxu0 %v1180
    %v1248 = vpop.f32.mrf.mxu0
    %v1249 = vadd.f32 0.0, %v1248
    %v1250 = vpop.f32.mrf.mxu0
    %1251 = vdwg.mxu0
    %v1253 = vrot.slane %v1249, 3
    %v1255 = vadd.f32 %v212, %v1253
    %v1256 = vxor.u32 %v1255, 2147483648
    %v1257 = vmul.f32 %v1256, 1.442695
    %v1258 = vpow.pop %v1257
    %v1259 = vadd.f32 %v1258, 1.0
    %v1260 = vrcp.pop %v1259
    %v1261 = vmul.f32 1.0, %v1260
    %v1262 = vtanh.pop %v1255
    %v1264 = vrot.slane %v1062, 7
    %v1266 = vmul.f32 %v1261, %v1264
    %1268 = vrot.lane.b32.xlu0 %v1262, 64
    %v1269 = vpop.permute.xlu0 %1268
    %v1271 = vmul.f32 %v1261, %v1269
    %1273 = vrot.lane.b32.xlu0 %v1271, 32
    %v1274 = vpop.permute.xlu0 %1273
    %v1276 = vadd.f32 %v1266, %v1274
    %v1277 = vtanh.pop %v1276
    %1279 = vrot.lane.b32.xlu0 %v1277, 64
    %v1280 = vpop.permute.xlu0 %1279
    %v1282 = vmul.f32 %v1261, %v1280
    %1283 = vrot.lane.b32.xlu0 %v1068, 32
    %v1284 = vpop.permute.xlu0 %1283
    %v1287 = vrot.slane %v1175, 4
    %1288 = vrot.lane.b32.xlu0 %v1287, 64
    %v1289 = vpop.permute.xlu0 %1288
    %v1291 = vsel %vm217, %v1284, %v1289
    %v1293 = vrot.slane %v1291, 4
    %v1294 = vsel %vm432, %v1293, 0
    %1296 = vmatprep.subr.mxu0 0.0
    %1297 = vmatpush1.msra.mxu0 0.0
    %1298 = vmatprep.subr.mxu0 0.0
    %1299 = vmatpush1.msra.mxu0 0.0
    %1300 = vmatprep.subr.mxu0 0.0
    %1301 = vmatpush1.msra.mxu0 0.0
    %1302 = vmatprep.subr.mxu0 0.0
    %1303 = vmatpush1.msra.mxu0 0.0
    %1304 = vmatprep.subr.mxu0 0.0
    %1305 = vmatpush1.msra.mxu0 0.0
    %1306 = vmatprep.subr.mxu0 0.0
    %1307 = vmatpush1.msra.mxu0 0.0
    %1308 = vmatprep.subr.mxu0 0.0
    %1309 = vmatpush1.msra.mxu0 0.0
    %1310 = vmatprep.subr.mxu0 0.0
    %1311 = vmatpush1.msra.mxu0 0.0
    %1312 = vmatprep.subr.mxu0 0.0
    %1313 = vmatpush1.msra.mxu0 %v129
    %1314 = vmatprep.subr.mxu0 0.0
    %1315 = vmatpush1.msra.mxu0 %v128
    %1316 = vmatprep.subr.mxu0 0.0
    %1317 = vmatpush1.msra.mxu0 %v127
    %1318 = vmatprep.subr.mxu0 0.0
    %1319 = vmatpush1.msra.mxu0 %v126
    %1320 = vmatprep.subr.mxu0 0.0
    %1321 = vmatpush1.msra.mxu0 %v125
    %1322 = vmatprep.subr.mxu0 0.0
    %1323 = vmatpush1.msra.mxu0 %v124
    %1324 = vmatprep.subr.mxu0 0.0
    %1325 = vmatpush1.msra.mxu0 %v123
    %1326 = vmatprep.subr.mxu0 0.0
    %1327 = vmatpush1.msra.mxu0 %v122
    %1328 = vmatprep.subr.mxu0 0.0
    %1329 = vmatpush2.msra.mxu0 0.0
    %1330 = vmatprep.subr.mxu0 0.0
    %1331 = vmatpush2.msra.mxu0 0.0
    %1332 = vmatprep.subr.mxu0 0.0
    %1333 = vmatpush2.msra.mxu0 0.0
    %1334 = vmatprep.subr.mxu0 0.0
    %1335 = vmatpush2.msra.mxu0 0.0
    %1336 = vmatprep.subr.mxu0 0.0
    %1337 = vmatpush2.msra.mxu0 0.0
    %1338 = vmatprep.subr.mxu0 0.0
    %1339 = vmatpush2.msra.mxu0 0.0
    %1340 = vmatprep.subr.mxu0 0.0
    %1341 = vmatpush2.msra.mxu0 0.0
    %1342 = vmatprep.subr.mxu0 0.0
    %1343 = vmatpush2.msra.mxu0 0.0
    %1344 = vmatprep.subr.mxu0 0.0
    %1345 = vmatpush2.msra.mxu0 0.0
    %1346 = vmatprep.subr.mxu0 0.0
    %1347 = vmatpush2.msra.mxu0 0.0
    %1348 = vmatprep.subr.mxu0 0.0
    %1349 = vmatpush2.msra.mxu0 0.0
    %1350 = vmatprep.subr.mxu0 0.0
    %1351 = vmatpush2.msra.mxu0 0.0
    %1352 = vmatprep.subr.mxu0 0.0
    %1353 = vmatpush2.msra.mxu0 0.0
    %1354 = vmatprep.subr.mxu0 0.0
    %1355 = vmatpush2.msra.mxu0 0.0
    %1356 = vmatprep.subr.mxu0 0.0
    %1357 = vmatpush2.msra.mxu0 0.0
    %1358 = vmatprep.subr.mxu0 0.0
    %1359 = vmatpush2.msra.mxu0 0.0
    %1360 = vmatprep.mubr.f32.mxu0 0.0
    %1361 = vmatmul.mubr.f32.gmra.mxu0 %v1294
    %v1362 = vpop.f32.mrf.mxu0
    %v1363 = vadd.f32 %v130, %v1362
    %v1364 = vpop.f32.mrf.mxu0
    %1365 = vdwg.mxu0
    %v1366 = vxor.u32 %v1363, 2147483648
    %v1367 = vmul.f32 %v1366, 1.442695
    %v1368 = vpow.pop %v1367
    %v1369 = vadd.f32 %v1368, 1.0
    %v1370 = vrcp.pop %v1369
    %v1371 = vmul.f32 1.0, %v1370
    %v1372 = vtanh.pop %v1363
    %v1373 = vmul.f32 %v1371, %v1169
    %1375 = vrot.lane.b32.xlu0 %v1372, 64
    %v1376 = vpop.permute.xlu0 %1375
    %v1378 = vmul.f32 %v1371, %v1376
    %1380 = vrot.lane.b32.xlu0 %v1378, 32
    %v1381 = vpop.permute.xlu0 %1380
    %v1383 = vadd.f32 %v1373, %v1381
    %v1384 = vtanh.pop %v1383
    %1386 = vrot.lane.b32.xlu0 %v1384, 64
    %v1387 = vpop.permute.xlu0 %1386
    %v1389 = vmul.f32 %v1371, %v1387
    %v1391 = vrot.slane %v1282, 5
    %1392 = vrot.lane.b32.xlu0 %v1391, 32
    %v1393 = vpop.permute.xlu0 %1392
    %v1394 = vsel %vm217, %v1393, 0
    %1396 = vmatprep.subr.mxu0 0.0
    %1397 = vmatpush1.msra.mxu0 0.0
    %1398 = vmatprep.subr.mxu0 0.0
    %1399 = vmatpush1.msra.mxu0 0.0
    %1400 = vmatprep.subr.mxu0 0.0
    %1401 = vmatpush1.msra.mxu0 0.0
    %1402 = vmatprep.subr.mxu0 0.0
    %1403 = vmatpush1.msra.mxu0 0.0
    %1404 = vmatprep.subr.mxu0 0.0
    %1405 = vmatpush1.msra.mxu0 0.0
    %1406 = vmatprep.subr.mxu0 0.0
    %1407 = vmatpush1.msra.mxu0 0.0
    %1408 = vmatprep.subr.mxu0 0.0
    %1409 = vmatpush1.msra.mxu0 0.0
    %1410 = vmatprep.subr.mxu0 0.0
    %1411 = vmatpush1.msra.mxu0 0.0
    %1412 = vmatprep.subr.mxu0 0.0
    %1413 = vmatpush1.msra.mxu0 0.0
    %1414 = vmatprep.subr.mxu0 0.0
    %1415 = vmatpush1.msra.mxu0 0.0
    %1416 = vmatprep.subr.mxu0 0.0
    %1417 = vmatpush1.msra.mxu0 0.0
    %1418 = vmatprep.subr.mxu0 0.0
    %1419 = vmatpush1.msra.mxu0 0.0
    %1420 = vmatprep.subr.mxu0 0.0
    %1421 = vmatpush1.msra.mxu0 %v121
    %1422 = vmatprep.subr.mxu0 0.0
    %1423 = vmatpush1.msra.mxu0 %v120
    %1424 = vmatprep.subr.mxu0 0.0
    %1425 = vmatpush1.msra.mxu0 %v119
    %1426 = vmatprep.subr.mxu0 0.0
    %1427 = vmatpush1.msra.mxu0 %v118
    %1428 = vmatprep.subr.mxu0 0.0
    %1429 = vmatpush2.msra.mxu0 0.0
    %1430 = vmatprep.subr.mxu0 0.0
    %1431 = vmatpush2.msra.mxu0 0.0
    %1432 = vmatprep.subr.mxu0 0.0
    %1433 = vmatpush2.msra.mxu0 0.0
    %1434 = vmatprep.subr.mxu0 0.0
    %1435 = vmatpush2.msra.mxu0 0.0
    %1436 = vmatprep.subr.mxu0 0.0
    %1437 = vmatpush2.msra.mxu0 0.0
    %1438 = vmatprep.subr.mxu0 0.0
    %1439 = vmatpush2.msra.mxu0 0.0
    %1440 = vmatprep.subr.mxu0 0.0
    %1441 = vmatpush2.msra.mxu0 0.0
    %1442 = vmatprep.subr.mxu0 0.0
    %1443 = vmatpush2.msra.mxu0 0.0
    %1444 = vmatprep.subr.mxu0 0.0
    %1445 = vmatpush2.msra.mxu0 0.0
    %1446 = vmatprep.subr.mxu0 0.0
    %1447 = vmatpush2.msra.mxu0 0.0
    %1448 = vmatprep.subr.mxu0 0.0
    %1449 = vmatpush2.msra.mxu0 0.0
    %1450 = vmatprep.subr.mxu0 0.0
    %1451 = vmatpush2.msra.mxu0 0.0
    %1452 = vmatprep.subr.mxu0 0.0
    %1453 = vmatpush2.msra.mxu0 0.0
    %1454 = vmatprep.subr.mxu0 0.0
    %1455 = vmatpush2.msra.mxu0 0.0
    %1456 = vmatprep.subr.mxu0 0.0
    %1457 = vmatpush2.msra.mxu0 0.0
    %1458 = vmatprep.subr.mxu0 0.0
    %1459 = vmatpush2.msra.mxu0 0.0
    %1460 = vmatprep.mubr.f32.mxu0 0.0
    %1461 = vmatmul.mubr.f32.gmra.mxu0 %v1394
    %v1462 = vpop.f32.mrf.mxu0
    %v1463 = vadd.f32 0.0, %v1462
    %v1464 = vpop.f32.mrf.mxu0
    %1465 = vdwg.mxu0
    %v1467 = vrot.slane %v1463, 2
    %v1469 = vadd.f32 %v212, %v1467
    %v1470 = vxor.u32 %v1469, 2147483648
    %v1471 = vmul.f32 %v1470, 1.442695
    %v1472 = vpow.pop %v1471
    %v1473 = vadd.f32 %v1472, 1.0
    %v1474 = vrcp.pop %v1473
    %v1475 = vmul.f32 1.0, %v1474
    %v1476 = vtanh.pop %v1469
    %v1478 = vrot.slane %v1276, 7
    %v1480 = vmul.f32 %v1475, %v1478
    %1482 = vrot.lane.b32.xlu0 %v1476, 64
    %v1483 = vpop.permute.xlu0 %1482
    %v1485 = vmul.f32 %v1475, %v1483
    %1487 = vrot.lane.b32.xlu0 %v1485, 32
    %v1488 = vpop.permute.xlu0 %1487
    %v1490 = vadd.f32 %v1480, %v1488
    %v1491 = vtanh.pop %v1490
    %1493 = vrot.lane.b32.xlu0 %v1491, 64
    %v1494 = vpop.permute.xlu0 %1493
    %v1496 = vmul.f32 %v1475, %v1494
    %1497 = vrot.lane.b32.xlu0 %v1282, 32
    %v1498 = vpop.permute.xlu0 %1497
    %v1501 = vrot.slane %v1389, 3
    %1502 = vrot.lane.b32.xlu0 %v1501, 64
    %v1503 = vpop.permute.xlu0 %1502
    %v1505 = vsel %vm217, %v1498, %v1503
    %v1507 = vrot.slane %v1505, 5
    %v1508 = vsel %vm432, %v1507, 0
    %1510 = vmatprep.subr.mxu0 0.0
    %1511 = vmatpush1.msra.mxu0 0.0
    %1512 = vmatprep.subr.mxu0 0.0
    %1513 = vmatpush1.msra.mxu0 0.0
    %1514 = vmatprep.subr.mxu0 0.0
    %1515 = vmatpush1.msra.mxu0 0.0
    %1516 = vmatprep.subr.mxu0 0.0
    %1517 = vmatpush1.msra.mxu0 0.0
    %1518 = vmatprep.subr.mxu0 0.0
    %1519 = vmatpush1.msra.mxu0 0.0
    %1520 = vmatprep.subr.mxu0 0.0
    %1521 = vmatpush1.msra.mxu0 0.0
    %1522 = vmatprep.subr.mxu0 0.0
    %1523 = vmatpush1.msra.mxu0 0.0
    %1524 = vmatprep.subr.mxu0 0.0
    %1525 = vmatpush1.msra.mxu0 0.0
    %1526 = vmatprep.subr.mxu0 0.0
    %1527 = vmatpush1.msra.mxu0 %v129
    %1528 = vmatprep.subr.mxu0 0.0
    %1529 = vmatpush1.msra.mxu0 %v128
    %1530 = vmatprep.subr.mxu0 0.0
    %1531 = vmatpush1.msra.mxu0 %v127
    %1532 = vmatprep.subr.mxu0 0.0
    %1533 = vmatpush1.msra.mxu0 %v126
    %1534 = vmatprep.subr.mxu0 0.0
    %1535 = vmatpush1.msra.mxu0 %v125
    %1536 = vmatprep.subr.mxu0 0.0
    %1537 = vmatpush1.msra.mxu0 %v124
    %1538 = vmatprep.subr.mxu0 0.0
    %1539 = vmatpush1.msra.mxu0 %v123
    %1540 = vmatprep.subr.mxu0 0.0
    %1541 = vmatpush1.msra.mxu0 %v122
    %1542 = vmatprep.subr.mxu0 0.0
    %1543 = vmatpush2.msra.mxu0 0.0
    %1544 = vmatprep.subr.mxu0 0.0
    %1545 = vmatpush2.msra.mxu0 0.0
    %1546 = vmatprep.subr.mxu0 0.0
    %1547 = vmatpush2.msra.mxu0 0.0
    %1548 = vmatprep.subr.mxu0 0.0
    %1549 = vmatpush2.msra.mxu0 0.0
    %1550 = vmatprep.subr.mxu0 0.0
    %1551 = vmatpush2.msra.mxu0 0.0
    %1552 = vmatprep.subr.mxu0 0.0
    %1553 = vmatpush2.msra.mxu0 0.0
    %1554 = vmatprep.subr.mxu0 0.0
    %1555 = vmatpush2.msra.mxu0 0.0
    %1556 = vmatprep.subr.mxu0 0.0
    %1557 = vmatpush2.msra.mxu0 0.0
    %1558 = vmatprep.subr.mxu0 0.0
    %1559 = vmatpush2.msra.mxu0 0.0
    %1560 = vmatprep.subr.mxu0 0.0
    %1561 = vmatpush2.msra.mxu0 0.0
    %1562 = vmatprep.subr.mxu0 0.0
    %1563 = vmatpush2.msra.mxu0 0.0
    %1564 = vmatprep.subr.mxu0 0.0
    %1565 = vmatpush2.msra.mxu0 0.0
    %1566 = vmatprep.subr.mxu0 0.0
    %1567 = vmatpush2.msra.mxu0 0.0
    %1568 = vmatprep.subr.mxu0 0.0
    %1569 = vmatpush2.msra.mxu0 0.0
    %1570 = vmatprep.subr.mxu0 0.0
    %1571 = vmatpush2.msra.mxu0 0.0
    %1572 = vmatprep.subr.mxu0 0.0
    %1573 = vmatpush2.msra.mxu0 0.0
    %1574 = vmatprep.mubr.f32.mxu0 0.0
    %1575 = vmatmul.mubr.f32.gmra.mxu0 %v1508
    %v1576 = vpop.f32.mrf.mxu0
    %v1577 = vadd.f32 %v130, %v1576
    %v1578 = vpop.f32.mrf.mxu0
    %1579 = vdwg.mxu0
    %v1580 = vxor.u32 %v1577, 2147483648
    %v1581 = vmul.f32 %v1580, 1.442695
    %v1582 = vpow.pop %v1581
    %v1583 = vadd.f32 %v1582, 1.0
    %v1584 = vrcp.pop %v1583
    %v1585 = vmul.f32 1.0, %v1584
    %v1586 = vtanh.pop %v1577
    %v1587 = vmul.f32 %v1585, %v1383
    %1589 = vrot.lane.b32.xlu0 %v1586, 64
    %v1590 = vpop.permute.xlu0 %1589
    %v1592 = vmul.f32 %v1585, %v1590
    %1594 = vrot.lane.b32.xlu0 %v1592, 32
    %v1595 = vpop.permute.xlu0 %1594
    %v1597 = vadd.f32 %v1587, %v1595
    %v1598 = vtanh.pop %v1597
    %1600 = vrot.lane.b32.xlu0 %v1598, 64
    %v1601 = vpop.permute.xlu0 %1600
    %v1603 = vmul.f32 %v1585, %v1601
    %v1605 = vrot.slane %v1496, 6
    %1606 = vrot.lane.b32.xlu0 %v1605, 32
    %v1607 = vpop.permute.xlu0 %1606
    %v1608 = vsel %vm217, %v1607, 0
    %1610 = vmatprep.subr.mxu0 0.0
    %1611 = vmatpush1.msra.mxu0 0.0
    %1612 = vmatprep.subr.mxu0 0.0
    %1613 = vmatpush1.msra.mxu0 0.0
    %1614 = vmatprep.subr.mxu0 0.0
    %1615 = vmatpush1.msra.mxu0 0.0
    %1616 = vmatprep.subr.mxu0 0.0
    %1617 = vmatpush1.msra.mxu0 0.0
    %1618 = vmatprep.subr.mxu0 0.0
    %1619 = vmatpush1.msra.mxu0 0.0
    %1620 = vmatprep.subr.mxu0 0.0
    %1621 = vmatpush1.msra.mxu0 0.0
    %1622 = vmatprep.subr.mxu0 0.0
    %1623 = vmatpush1.msra.mxu0 0.0
    %1624 = vmatprep.subr.mxu0 0.0
    %1625 = vmatpush1.msra.mxu0 0.0
    %1626 = vmatprep.subr.mxu0 0.0
    %1627 = vmatpush1.msra.mxu0 0.0
    %1628 = vmatprep.subr.mxu0 0.0
    %1629 = vmatpush1.msra.mxu0 0.0
    %1630 = vmatprep.subr.mxu0 0.0
    %1631 = vmatpush1.msra.mxu0 0.0
    %1632 = vmatprep.subr.mxu0 0.0
    %1633 = vmatpush1.msra.mxu0 0.0
    %1634 = vmatprep.subr.mxu0 0.0
    %1635 = vmatpush1.msra.mxu0 %v121
    %1636 = vmatprep.subr.mxu0 0.0
    %1637 = vmatpush1.msra.mxu0 %v120
    %1638 = vmatprep.subr.mxu0 0.0
    %1639 = vmatpush1.msra.mxu0 %v119
    %1640 = vmatprep.subr.mxu0 0.0
    %1641 = vmatpush1.msra.mxu0 %v118
    %1642 = vmatprep.subr.mxu0 0.0
    %1643 = vmatpush2.msra.mxu0 0.0
    %1644 = vmatprep.subr.mxu0 0.0
    %1645 = vmatpush2.msra.mxu0 0.0
    %1646 = vmatprep.subr.mxu0 0.0
    %1647 = vmatpush2.msra.mxu0 0.0
    %1648 = vmatprep.subr.mxu0 0.0
    %1649 = vmatpush2.msra.mxu0 0.0
    %1650 = vmatprep.subr.mxu0 0.0
    %1651 = vmatpush2.msra.mxu0 0.0
    %1652 = vmatprep.subr.mxu0 0.0
    %1653 = vmatpush2.msra.mxu0 0.0
    %1654 = vmatprep.subr.mxu0 0.0
    %1655 = vmatpush2.msra.mxu0 0.0
    %1656 = vmatprep.subr.mxu0 0.0
    %1657 = vmatpush2.msra.mxu0 0.0
    %1658 = vmatprep.subr.mxu0 0.0
    %1659 = vmatpush2.msra.mxu0 0.0
    %1660 = vmatprep.subr.mxu0 0.0
    %1661 = vmatpush2.msra.mxu0 0.0
    %1662 = vmatprep.subr.mxu0 0.0
    %1663 = vmatpush2.msra.mxu0 0.0
    %1664 = vmatprep.subr.mxu0 0.0
    %1665 = vmatpush2.msra.mxu0 0.0
    %1666 = vmatprep.subr.mxu0 0.0
    %1667 = vmatpush2.msra.mxu0 0.0
    %1668 = vmatprep.subr.mxu0 0.0
    %1669 = vmatpush2.msra.mxu0 0.0
    %1670 = vmatprep.subr.mxu0 0.0
    %1671 = vmatpush2.msra.mxu0 0.0
    %1672 = vmatprep.subr.mxu0 0.0
    %1673 = vmatpush2.msra.mxu0 0.0
    %1674 = vmatprep.mubr.f32.mxu0 0.0
    %1675 = vmatmul.mubr.f32.gmra.mxu0 %v1608
    %v1676 = vpop.f32.mrf.mxu0
    %v1677 = vadd.f32 0.0, %v1676
    %v1678 = vpop.f32.mrf.mxu0
    %1679 = vdwg.mxu0
    %v1681 = vrot.slane %v1677, 1
    %v1683 = vadd.f32 %v212, %v1681
    %v1684 = vxor.u32 %v1683, 2147483648
    %v1685 = vmul.f32 %v1684, 1.442695
    %v1686 = vpow.pop %v1685
    %v1687 = vadd.f32 %v1686, 1.0
    %v1688 = vrcp.pop %v1687
    %v1689 = vmul.f32 1.0, %v1688
    %v1690 = vtanh.pop %v1683
    %v1692 = vrot.slane %v1490, 7
    %v1694 = vmul.f32 %v1689, %v1692
    %1696 = vrot.lane.b32.xlu0 %v1690, 64
    %v1697 = vpop.permute.xlu0 %1696
    %v1699 = vmul.f32 %v1689, %v1697
    %1701 = vrot.lane.b32.xlu0 %v1699, 32
    %v1702 = vpop.permute.xlu0 %1701
    %v1704 = vadd.f32 %v1694, %v1702
    %v1705 = vtanh.pop %v1704
    %1707 = vrot.lane.b32.xlu0 %v1705, 64
    %v1708 = vpop.permute.xlu0 %1707
    %v1710 = vmul.f32 %v1689, %v1708
    %1711 = vrot.lane.b32.xlu0 %v1496, 32
    %v1712 = vpop.permute.xlu0 %1711
    %v1715 = vrot.slane %v1603, 2
    %1716 = vrot.lane.b32.xlu0 %v1715, 64
    %v1717 = vpop.permute.xlu0 %1716
    %v1719 = vsel %vm217, %v1712, %v1717
    %v1721 = vrot.slane %v1719, 6
    %v1722 = vsel %vm432, %v1721, 0
    %1724 = vmatprep.subr.mxu0 0.0
    %1725 = vmatpush1.msra.mxu0 0.0
    %1726 = vmatprep.subr.mxu0 0.0
    %1727 = vmatpush1.msra.mxu0 0.0
    %1728 = vmatprep.subr.mxu0 0.0
    %1729 = vmatpush1.msra.mxu0 0.0
    %1730 = vmatprep.subr.mxu0 0.0
    %1731 = vmatpush1.msra.mxu0 0.0
    %1732 = vmatprep.subr.mxu0 0.0
    %1733 = vmatpush1.msra.mxu0 0.0
    %1734 = vmatprep.subr.mxu0 0.0
    %1735 = vmatpush1.msra.mxu0 0.0
    %1736 = vmatprep.subr.mxu0 0.0
    %1737 = vmatpush1.msra.mxu0 0.0
    %1738 = vmatprep.subr.mxu0 0.0
    %1739 = vmatpush1.msra.mxu0 0.0
    %1740 = vmatprep.subr.mxu0 0.0
    %1741 = vmatpush1.msra.mxu0 %v129
    %1742 = vmatprep.subr.mxu0 0.0
    %1743 = vmatpush1.msra.mxu0 %v128
    %1744 = vmatprep.subr.mxu0 0.0
    %1745 = vmatpush1.msra.mxu0 %v127
    %1746 = vmatprep.subr.mxu0 0.0
    %1747 = vmatpush1.msra.mxu0 %v126
    %1748 = vmatprep.subr.mxu0 0.0
    %1749 = vmatpush1.msra.mxu0 %v125
    %1750 = vmatprep.subr.mxu0 0.0
    %1751 = vmatpush1.msra.mxu0 %v124
    %1752 = vmatprep.subr.mxu0 0.0
    %1753 = vmatpush1.msra.mxu0 %v123
    %1754 = vmatprep.subr.mxu0 0.0
    %1755 = vmatpush1.msra.mxu0 %v122
    %1756 = vmatprep.subr.mxu0 0.0
    %1757 = vmatpush2.msra.mxu0 0.0
    %1758 = vmatprep.subr.mxu0 0.0
    %1759 = vmatpush2.msra.mxu0 0.0
    %1760 = vmatprep.subr.mxu0 0.0
    %1761 = vmatpush2.msra.mxu0 0.0
    %1762 = vmatprep.subr.mxu0 0.0
    %1763 = vmatpush2.msra.mxu0 0.0
    %1764 = vmatprep.subr.mxu0 0.0
    %1765 = vmatpush2.msra.mxu0 0.0
    %1766 = vmatprep.subr.mxu0 0.0
    %1767 = vmatpush2.msra.mxu0 0.0
    %1768 = vmatprep.subr.mxu0 0.0
    %1769 = vmatpush2.msra.mxu0 0.0
    %1770 = vmatprep.subr.mxu0 0.0
    %1771 = vmatpush2.msra.mxu0 0.0
    %1772 = vmatprep.subr.mxu0 0.0
    %1773 = vmatpush2.msra.mxu0 0.0
    %1774 = vmatprep.subr.mxu0 0.0
    %1775 = vmatpush2.msra.mxu0 0.0
    %1776 = vmatprep.subr.mxu0 0.0
    %1777 = vmatpush2.msra.mxu0 0.0
    %1778 = vmatprep.subr.mxu0 0.0
    %1779 = vmatpush2.msra.mxu0 0.0
    %1780 = vmatprep.subr.mxu0 0.0
    %1781 = vmatpush2.msra.mxu0 0.0
    %1782 = vmatprep.subr.mxu0 0.0
    %1783 = vmatpush2.msra.mxu0 0.0
    %1784 = vmatprep.subr.mxu0 0.0
    %1785 = vmatpush2.msra.mxu0 0.0
    %1786 = vmatprep.subr.mxu0 0.0
    %1787 = vmatpush2.msra.mxu0 0.0
    %1788 = vmatprep.mubr.f32.mxu0 0.0
    %1789 = vmatmul.mubr.f32.gmra.mxu0 %v1722
    %v1790 = vpop.f32.mrf.mxu0
    %v1791 = vadd.f32 %v130, %v1790
    %v1792 = vpop.f32.mrf.mxu0
    %1793 = vdwg.mxu0
    %v1794 = vxor.u32 %v1791, 2147483648
    %v1795 = vmul.f32 %v1794, 1.442695
    %v1796 = vpow.pop %v1795
    %v1797 = vadd.f32 %v1796, 1.0
    %v1798 = vrcp.pop %v1797
    %v1799 = vmul.f32 1.0, %v1798
    %v1800 = vtanh.pop %v1791
    %v1801 = vmul.f32 %v1799, %v1597
    %1803 = vrot.lane.b32.xlu0 %v1800, 64
    %v1804 = vpop.permute.xlu0 %1803
    %v1806 = vmul.f32 %v1799, %v1804
    %1808 = vrot.lane.b32.xlu0 %v1806, 32
    %v1809 = vpop.permute.xlu0 %1808
    %v1811 = vadd.f32 %v1801, %v1809
    %v1812 = vtanh.pop %v1811
    %1814 = vrot.lane.b32.xlu0 %v1812, 64
    %v1815 = vpop.permute.xlu0 %1814
    %v1817 = vmul.f32 %v1799, %v1815
    %1819 = vrot.lane.b32.xlu0 %v1710, 32
    %v1820 = vpop.permute.xlu0 %1819
    %v1823 = vrot.slane %v1817, 1
    %1824 = vrot.lane.b32.xlu0 %v1823, 64
    %v1825 = vpop.permute.xlu0 %1824
    %v1827 = vsel %vm217, %v1820, %v1825
    %v1829 = vrot.slane %v1827, 7
    %v1830 = vsel %vm432, %v1829, 0
    %1832 = vmatprep.subr.mxu0 0.0
    %1833 = vmatpush1.msra.mxu0 0.0
    %1834 = vmatprep.subr.mxu0 0.0
    %1835 = vmatpush1.msra.mxu0 0.0
    %1836 = vmatprep.subr.mxu0 0.0
    %1837 = vmatpush1.msra.mxu0 0.0
    %1838 = vmatprep.subr.mxu0 0.0
    %1839 = vmatpush1.msra.mxu0 0.0
    %1840 = vmatprep.subr.mxu0 0.0
    %1841 = vmatpush1.msra.mxu0 0.0
    %1842 = vmatprep.subr.mxu0 0.0
    %1843 = vmatpush1.msra.mxu0 0.0
    %1844 = vmatprep.subr.mxu0 0.0
    %1845 = vmatpush1.msra.mxu0 0.0
    %1846 = vmatprep.subr.mxu0 0.0
    %1847 = vmatpush1.msra.mxu0 0.0
    %1848 = vmatprep.subr.mxu0 0.0
    %1849 = vmatpush1.msra.mxu0 %v129
    %1850 = vmatprep.subr.mxu0 0.0
    %1851 = vmatpush1.msra.mxu0 %v128
    %1852 = vmatprep.subr.mxu0 0.0
    %1853 = vmatpush1.msra.mxu0 %v127
    %1854 = vmatprep.subr.mxu0 0.0
    %1855 = vmatpush1.msra.mxu0 %v126
    %1856 = vmatprep.subr.mxu0 0.0
    %1857 = vmatpush1.msra.mxu0 %v125
    %1858 = vmatprep.subr.mxu0 0.0
    %1859 = vmatpush1.msra.mxu0 %v124
    %1860 = vmatprep.subr.mxu0 0.0
    %1861 = vmatpush1.msra.mxu0 %v123
    %1862 = vmatprep.subr.mxu0 0.0
    %1863 = vmatpush1.msra.mxu0 %v122
    %1864 = vmatprep.subr.mxu0 0.0
    %1865 = vmatpush2.msra.mxu0 0.0
    %1866 = vmatprep.subr.mxu0 0.0
    %1867 = vmatpush2.msra.mxu0 0.0
    %1868 = vmatprep.subr.mxu0 0.0
    %1869 = vmatpush2.msra.mxu0 0.0
    %1870 = vmatprep.subr.mxu0 0.0
    %1871 = vmatpush2.msra.mxu0 0.0
    %1872 = vmatprep.subr.mxu0 0.0
    %1873 = vmatpush2.msra.mxu0 0.0
    %1874 = vmatprep.subr.mxu0 0.0
    %1875 = vmatpush2.msra.mxu0 0.0
    %1876 = vmatprep.subr.mxu0 0.0
    %1877 = vmatpush2.msra.mxu0 0.0
    %1878 = vmatprep.subr.mxu0 0.0
    %1879 = vmatpush2.msra.mxu0 0.0
    %1880 = vmatprep.subr.mxu0 0.0
    %1881 = vmatpush2.msra.mxu0 0.0
    %1882 = vmatprep.subr.mxu0 0.0
    %1883 = vmatpush2.msra.mxu0 0.0
    %1884 = vmatprep.subr.mxu0 0.0
    %1885 = vmatpush2.msra.mxu0 0.0
    %1886 = vmatprep.subr.mxu0 0.0
    %1887 = vmatpush2.msra.mxu0 0.0
    %1888 = vmatprep.subr.mxu0 0.0
    %1889 = vmatpush2.msra.mxu0 0.0
    %1890 = vmatprep.subr.mxu0 0.0
    %1891 = vmatpush2.msra.mxu0 0.0
    %1892 = vmatprep.subr.mxu0 0.0
    %1893 = vmatpush2.msra.mxu0 0.0
    %1894 = vmatprep.subr.mxu0 0.0
    %1895 = vmatpush2.msra.mxu0 0.0
    %1896 = vmatprep.mubr.f32.mxu0 0.0
    %1897 = vmatmul.mubr.f32.gmra.mxu0 %v1830
    %v1898 = vpop.f32.mrf.mxu0
    %v1899 = vadd.f32 %v130, %v1898
    %v1900 = vpop.f32.mrf.mxu0
    %1901 = vdwg.mxu0
    %v1902 = vxor.u32 %v1899, 2147483648
    %v1903 = vmul.f32 %v1902, 1.442695
    %v1904 = vpow.pop %v1903
    %v1905 = vadd.f32 %v1904, 1.0
    %v1906 = vrcp.pop %v1905
    %v1907 = vmul.f32 1.0, %v1906
    %v1908 = vtanh.pop %v1899
    %v1909 = vmul.f32 %v1907, %v1811
    %1911 = vrot.lane.b32.xlu0 %v1908, 64
    %v1912 = vpop.permute.xlu0 %1911
    %v1914 = vmul.f32 %v1907, %v1912
    %1916 = vrot.lane.b32.xlu0 %v1914, 32
    %v1917 = vpop.permute.xlu0 %1916
    %v1919 = vadd.f32 %v1909, %v1917
    %v1920 = vtanh.pop %v1919
    %1922 = vrot.lane.b32.xlu0 %v1920, 64
    %v1923 = vpop.permute.xlu0 %1922
    %v1925 = vmul.f32 %v1907, %v1923
    %v1926 = vrot.slane %v747, 7
    %v1928 = vrot.slane %v961, 6
    %v1930 = vrot.slane %v1175, 5
    %v1932 = vrot.slane %v1389, 4
    %v1934 = vrot.slane %v1603, 3
    %v1936 = vrot.slane %v1817, 2
    %v1939 = vrot.slane %v1925, 1
    %vm1941 = vcmask 1040384
    %v1942 = vsel %vm1941, %v533, %v1926
    %vm1943 = vcmask 1041408
    %v1944 = vsel %vm1943, %v1942, %v1928
    %vm1945 = vcmask 1042432
    %v1946 = vsel %vm1945, %v1944, %v1930
    %vm1947 = vcmask 1043456
    %v1948 = vsel %vm1947, %v1946, %v1932
    %vm1949 = vcmask 1044480
    %v1950 = vsel %vm1949, %v1948, %v1934
    %vm1951 = vcmask 1045504
    %v1952 = vsel %vm1951, %v1950, %v1936
    %vm1953 = vcmask 1046528
    %v1954 = vsel %vm1953, %v1952, %v1939
    %v1955 = vld [vmem:[#allocation11] sm:$0xff]
    %v1956 = vld [vmem:[#allocation11 + $0x8] sm:$0xff]
    %v1957 = vld [vmem:[#allocation11 + $0x10] sm:$0xff]
    %v1958 = vld [vmem:[#allocation11 + $0x18] sm:$0xff]
    %v1959 = vld [vmem:[%s9] sm:$0x1]
    %v1961 = vlaneseq
    %v1962 = vshrl.u32 %v1961, 7
    %v1963 = vsub.s32 0, %v1962
    %v1964 = vrot.slane %v1959, %v1963
    %1967 = vrot.lane.b32.xlu0 %v1954, 32
    %v1968 = vpop.permute.xlu0 %1967
    %v1969 = vsel %vm217, %v1968, 0
    %1971 = vmatprep.subr.mxu0 0.0
    %1972 = vmatpush1.msra.mxu0 0.0
    %1973 = vmatprep.subr.mxu0 0.0
    %1974 = vmatpush1.msra.mxu0 0.0
    %1975 = vmatprep.subr.mxu0 0.0
    %1976 = vmatpush1.msra.mxu0 0.0
    %1977 = vmatprep.subr.mxu0 0.0
    %1978 = vmatpush1.msra.mxu0 0.0
    %1979 = vmatprep.subr.mxu0 0.0
    %1980 = vmatpush1.msra.mxu0 0.0
    %1981 = vmatprep.subr.mxu0 0.0
    %1982 = vmatpush1.msra.mxu0 0.0
    %1983 = vmatprep.subr.mxu0 0.0
    %1984 = vmatpush1.msra.mxu0 0.0
    %1985 = vmatprep.subr.mxu0 0.0
    %1986 = vmatpush1.msra.mxu0 0.0
    %1987 = vmatprep.subr.mxu0 0.0
    %1988 = vmatpush1.msra.mxu0 0.0
    %1989 = vmatprep.subr.mxu0 0.0
    %1990 = vmatpush1.msra.mxu0 0.0
    %1991 = vmatprep.subr.mxu0 0.0
    %1992 = vmatpush1.msra.mxu0 0.0
    %1993 = vmatprep.subr.mxu0 0.0
    %1994 = vmatpush1.msra.mxu0 0.0
    %1995 = vmatprep.subr.mxu0 0.0
    %1996 = vmatpush1.msra.mxu0 %v1958
    %1997 = vmatprep.subr.mxu0 0.0
    %1998 = vmatpush1.msra.mxu0 %v1957
    %1999 = vmatprep.subr.mxu0 0.0
    %2000 = vmatpush1.msra.mxu0 %v1956
    %2001 = vmatprep.subr.mxu0 0.0
    %2002 = vmatpush1.msra.mxu0 %v1955
    %2003 = vmatprep.subr.mxu0 0.0
    %2004 = vmatpush2.msra.mxu0 0.0
    %2005 = vmatprep.subr.mxu0 0.0
    %2006 = vmatpush2.msra.mxu0 0.0
    %2007 = vmatprep.subr.mxu0 0.0
    %2008 = vmatpush2.msra.mxu0 0.0
    %2009 = vmatprep.subr.mxu0 0.0
    %2010 = vmatpush2.msra.mxu0 0.0
    %2011 = vmatprep.subr.mxu0 0.0
    %2012 = vmatpush2.msra.mxu0 0.0
    %2013 = vmatprep.subr.mxu0 0.0
    %2014 = vmatpush2.msra.mxu0 0.0
    %2015 = vmatprep.subr.mxu0 0.0
    %2016 = vmatpush2.msra.mxu0 0.0
    %2017 = vmatprep.subr.mxu0 0.0
    %2018 = vmatpush2.msra.mxu0 0.0
    %2019 = vmatprep.subr.mxu0 0.0
    %2020 = vmatpush2.msra.mxu0 0.0
    %2021 = vmatprep.subr.mxu0 0.0
    %2022 = vmatpush2.msra.mxu0 0.0
    %2023 = vmatprep.subr.mxu0 0.0
    %2024 = vmatpush2.msra.mxu0 0.0
    %2025 = vmatprep.subr.mxu0 0.0
    %2026 = vmatpush2.msra.mxu0 0.0
    %2027 = vmatprep.subr.mxu0 0.0
    %2028 = vmatpush2.msra.mxu0 0.0
    %2029 = vmatprep.subr.mxu0 0.0
    %2030 = vmatpush2.msra.mxu0 0.0
    %2031 = vmatprep.subr.mxu0 0.0
    %2032 = vmatpush2.msra.mxu0 0.0
    %2033 = vmatprep.subr.mxu0 0.0
    %2034 = vmatpush2.msra.mxu0 0.0
    %2035 = vmatprep.mubr.f32.mxu0 0.0
    %2036 = vmatmul.mubr.f32.gmra.mxu0 %v1969
    %v2037 = vpop.f32.mrf.mxu0
    %v2038 = vadd.f32 %v1964, %v2037
    %v2039 = vpop.f32.mrf.mxu0
    %2040 = vdwg.mxu0
    %2041 = vst [vmem:[#allocation13] sm:$0xff] %v2038
    %v2042 = vrot.slane %v1710, 7
    %v2044 = vrot.slane %v1925, 7
    %v2046 = vsel %vm1941, %v2042, %v2044
    %2048 = vrot.lane.b32.xlu0 %v2046, 32
    %v2049 = vpop.permute.xlu0 %2048
    %vm2051 = vcmask 254976
    %2052 = vst.msk [vmem:[#allocation14] sm:$0x3] %vm2051, %v2049
    %v2054 = vrot.slane %v1704, 7
    %v2057 = vrot.slane %v1919, 7
    %v2059 = vsel %vm1941, %v2054, %v2057
    %2061 = vrot.lane.b32.xlu0 %v2059, 96
    %v2062 = vpop.permute.xlu0 %2061
    %2064 = vst.msk [vmem:[#allocation16] sm:$0x3] %vm2051, %v2062
    // Predicated region
    $region66: #{tpu_custom_call.1} parent=1 // pred_check
      _
    $region67: #{tpu_custom_call.1} parent=1 // pred_check_branch
      %2066 = sbr.rel (0) target = $region69
    $region68: #{tpu_custom_call.1} parent=1 // pred_region
      %s2068 = ssub.s32 128, 128
      %2069 = vsyncadd [#allocation4], %s2068
      %s2071 = sshll.u32 [#allocation13], 4
      %s2072 = int_to_ptr.vmem [resolvable:$true] %s2071
      %2074 = dma.vmem_to_hbm [thread:$0]  %s2072, 128, %s10, [#allocation4]
    $region69: #{tpu_custom_call.1} parent=1 // pred_fallthru
      _
    // Predicated region
    $region70: #{tpu_custom_call.1} parent=1 // pred_check
      _
    $region71: #{tpu_custom_call.1} parent=1 // pred_check_branch
      %2076 = sbr.rel (0) target = $region73
    $region72: #{tpu_custom_call.1} parent=1 // pred_region
      %s2078 = ssub.s32 32, 32
      %2079 = vsyncadd [#allocation15], %s2078
      %s2081 = sshll.u32 [#allocation14], 4
      %s2082 = int_to_ptr.vmem [resolvable:$true] %s2081
      %2084 = dma.vmem_to_hbm [thread:$0]  %s2082, 32, %s11, [#allocation15]
    $region73: #{tpu_custom_call.1} parent=1 // pred_fallthru
      _
    // Predicated region
    $region74: #{tpu_custom_call.1} parent=1 // pred_check
      _
    $region75: #{tpu_custom_call.1} parent=1 // pred_check_branch
      %2086 = sbr.rel (0) target = $region77
    $region76: #{tpu_custom_call.1} parent=1 // pred_region
      %s2088 = ssub.s32 32, 32
      %2089 = vsyncadd [#allocation15], %s2088
      %s2091 = sshll.u32 [#allocation16], 4
      %s2092 = int_to_ptr.vmem [resolvable:$true] %s2091
      %2094 = dma.vmem_to_hbm [thread:$0]  %s2092, 32, %s12, [#allocation15]
    $region77: #{tpu_custom_call.1} parent=1 // pred_fallthru
      _
    // Predicated region
    $region78: #{tpu_custom_call.1} parent=1 // pred_check
      _
    $region79: #{tpu_custom_call.1} parent=1 // pred_check_branch
      %2096 = sbr.rel (0) target = $region81
    $region80: #{tpu_custom_call.1} parent=1 // pred_region
      %2097 = dma.done [#allocation4], 128
    $region81: #{tpu_custom_call.1} parent=1 // pred_fallthru
      _
    // Predicated region
    $region82: #{tpu_custom_call.1} parent=1 // pred_check
      _
    $region83: #{tpu_custom_call.1} parent=1 // pred_check_branch
      %2099 = sbr.rel (0) target = $region85
    $region84: #{tpu_custom_call.1} parent=1 // pred_region
      %2100 = dma.done [#allocation15], 32
    $region85: #{tpu_custom_call.1} parent=1 // pred_fallthru
      _
    // Predicated region
    $region86: #{tpu_custom_call.1} parent=1 // pred_check
      _
    $region87: #{tpu_custom_call.1} parent=1 // pred_check_branch
      %2102 = sbr.rel (0) target = $region89
    $region88: #{tpu_custom_call.1} parent=1 // pred_region
      %2103 = dma.done [#allocation15], 32
    $region89: #{tpu_custom_call.1} parent=1 // pred_fallthru
      _
    %2104 = vsyncpa [#allocation3], 1
    %2105 = vsyncpa [#allocation6], 1
    %2106 = vsyncpa [#allocation9], 1
    %2107 = vsyncpa [#allocation12], 1
    %2108 = vsyncpa [#allocation4], 1
    %2109 = vsyncpa [#allocation15], 1

</llo_original>
